<compile_context>
chip_gen: v7x
topology: tpu7x:2x2x1
jax: 0.10.0
libtpu: 0.0.40
codegen_flags: <defaults>
</compile_context>

<pallas_src>
import functools

import jax
import jax.numpy as jnp
from jax.experimental import pallas as pl
from jax.experimental.pallas import tpu as pltpu  # noqa: F401  (TPU backend)

EPS = 1e-5
LANES = 128


# --------------------------------------------------------------------------
# Single fused kernel: conv+BN+ReLU+pool (block1) -> conv+BN+ReLU+pool
# (block2) -> residual add.  Whole problem fits in VMEM -> one grid step.
# --------------------------------------------------------------------------
def _fused_model_kernel(a1_ref, xr_ref, w1_ref, w2_ref, e_ref,
                        g1_ref, b1_ref, g2_ref, b2_ref, o_ref,
                        *, N, H, W, C):
    # a1_ref: (N*H*W, Kp)   bf16  im2col patches for block1 (built in wrapper)
    # xr_ref: (N, C*H*W)    f32   NCHW-flat lane-dense residual
    # w1_ref: (Kp, C)       bf16  block1 conv weights, im2col layout (ky,kx,ci)
    # w2_ref: (P*C, P*C)    bf16  block2 conv as dense matrix (see wrapper)
    # e_ref : (C, C*H*W)    bf16  0/1 expand: channel c -> lanes [c*HW,(c+1)*HW)
    # g*/b*_ref: (1, C)     f32   BN gamma / beta per block
    # o_ref : (N, C*H*W)    f32   NCHW-flat lane-dense output
    Ho, Wo = H // 2, W // 2
    P = Ho * Wo
    PC = P * C
    R1 = N * H * W
    R2 = N * P

    # ---------------- block1: 3x3 conv = ONE im2col matmul ------------------
    acc1 = jnp.dot(a1_ref[...], w1_ref[...],
                   preferred_element_type=jnp.float32)              # (R1, C)
    # conv bias omitted: train-mode BN subtracts the batch mean, so a
    # per-channel bias cancels exactly (NOT valid for eval-mode BN).

    # ---------------- block1: BN (train stats, centered var) + ReLU ---------
    mean1 = jnp.sum(acc1, axis=0, keepdims=True) * (1.0 / R1)       # (1, C)
    d1 = acc1 - mean1
    var1 = jnp.sum(d1 * d1, axis=0, keepdims=True) * (1.0 / R1)
    sc1 = g1_ref[...] * jax.lax.rsqrt(var1 + EPS)
    y1 = jnp.maximum(d1 * sc1 + b1_ref[...], 0.0)                   # (R1, C)

    # ---------------- block1: MaxPool 2x2 stride 2 (sublane reshapes only) --
    y1 = jnp.max(y1.reshape(N * Ho, 2, W, C), axis=1)               # (N*Ho, W, C)
    y1 = jnp.max(y1.reshape(R2, 2, C), axis=1)                      # (R2, C)
    h1 = y1.reshape(N, P, C)                                        # (N, P, C)

    # ------- block2: 3x3 conv (pad=1) on the tiny Ho x Wo (=2x2) input ------
    # Every input position feeds every output position -> one dense
    # (N, P*C) @ (P*C, P*C) matmul (weights rearranged in the wrapper).
    a2 = jnp.concatenate([h1[:, p, :] for p in range(P)],
                         axis=-1).astype(jnp.bfloat16)               # (N, PC)
    acc2 = jnp.dot(a2, w2_ref[...],
                   preferred_element_type=jnp.float32)               # (N, PC)

    # ---------------- block2: BN + ReLU --------------------------------------
    # Per-channel stats are folded across the P lane-groups and per-channel
    # scale/shift are tiled back to PC lanes via 0/1 matrices on the MXU
    # (instead of lane slicing / lane concats).  The fold/tile matrices are
    # built in-kernel from 2-D iotas (16 vregs each, a few VPU ops).
    rf = jax.lax.broadcasted_iota(jnp.int32, (PC, C), 0)
    cf = jax.lax.broadcasted_iota(jnp.int32, (PC, C), 1)
    ct = jax.lax.broadcasted_iota(jnp.int32, (C, PC), 0)
    jt = jax.lax.broadcasted_iota(jnp.int32, (C, PC), 1)
    fold = jnp.zeros((PC, C), jnp.float32)                           # fold[p*C+c, c] = 1
    tile = jnp.zeros((C, PC), jnp.float32)                           # tile[c, p*C+c] = 1
    for p in range(P):
        fold = fold + jnp.where(rf == cf + p * C, 1.0, 0.0)
        tile = tile + jnp.where(jt == ct + p * C, 1.0, 0.0)

    inv2 = 1.0 / R2
    mean2 = jnp.dot(jnp.sum(acc2, axis=0, keepdims=True), fold,
                    preferred_element_type=jnp.float32) * inv2       # (1, C)
    mean2t = jnp.dot(mean2, tile, preferred_element_type=jnp.float32)  # (1, PC)
    d2 = acc2 - mean2t
    var2 = jnp.dot(jnp.sum(d2 * d2, axis=0, keepdims=True), fold,
                   preferred_element_type=jnp.float32) * inv2        # (1, C)
    sc2 = g2_ref[...] * jax.lax.rsqrt(var2 + EPS)                    # (1, C)
    sc2t = jnp.dot(sc2, tile, preferred_element_type=jnp.float32)    # (1, PC)
    b2t = jnp.dot(b2_ref[...], tile, preferred_element_type=jnp.float32)
    y2 = jnp.maximum(d2 * sc2t + b2t, 0.0)                           # (N, PC)

    # ---------------- block2: MaxPool (Ho x Wo -> 1x1), log-tree lane max ---
    m = jnp.maximum(y2[:, :2 * C], y2[:, 2 * C:])                    # (N, 2C)
    h2 = jnp.maximum(m[:, :C], m[:, C:])                             # (N, C)

    # ---------------- residual add, NCHW-flat lane-dense output -------------
    # Expand each channel value to its H*W flat positions with the 0/1 bf16
    # expand matrix on the MXU, then add to the untransposed residual.
    exp = jnp.dot(h2.astype(jnp.bfloat16), e_ref[...],
                  preferred_element_type=jnp.float32)                # (N, C*H*W)
    o_ref[...] = (xr_ref[...] + exp).astype(o_ref.dtype)


# --------------------------------------------------------------------------
# Wrapper: weight rearrangement + wrapper-side im2col + pallas_call
# --------------------------------------------------------------------------
def _build_w2_dense(w_hwio, Ho, Wo):
    """(3,3,Cin,Cout) -> (Ho*Wo*Cin, Ho*Wo*Cout); valid because Ho,Wo<=2 so
    every (input pos, output pos) pair maps to a real kernel tap."""
    assert Ho <= 2 and Wo <= 2
    blocks = []
    for iy in range(Ho):
        for ix in range(Wo):
            row = []
            for oy in range(Ho):
                for ox in range(Wo):
                    row.append(w_hwio[iy - oy + 1, ix - ox + 1])     # (Cin, Cout)
            blocks.append(row)
    return jnp.block(blocks)


@jax.jit
def model_forward(x_nchw, params):
    N, C, H, W = x_nchw.shape
    # Residual broadcast only type-checks when two pools collapse spatial to 1x1.
    assert H == 4 and W == 4 and C == 64, "forward only well-defined for 4x4x64"
    Ho, Wo = H // 2, W // 2
    P = Ho * Wo
    HW = H * W
    R1 = N * H * W
    K9 = 9 * C
    Kp = pl.cdiv(K9, LANES) * LANES           # 576 -> 640: lane-aligned contraction

    w1, _bc1, g1, be1 = params["block1"]      # conv bias is dead under train BN
    w2, _bc2, g2, be2 = params["block2"]

    # Conv path only: im2col in bf16 at the HBM boundary (fuses with the
    # transpose/pad HLOs), columns ordered (ky, kx, ci), K zero-padded to Kp.
    x_nhwc = jnp.transpose(x_nchw, (0, 2, 3, 1))
    xp = jnp.pad(x_nhwc, ((0, 0), (1, 1), (1, 1), (0, 0)))
    cols = [xp[:, ky:ky + H, kx:kx + W, :].reshape(R1, C)
            for ky in range(3) for kx in range(3)]
    a1 = jnp.concatenate(cols, axis=-1).astype(jnp.bfloat16)         # (R1, 9C)
    a1 = jnp.pad(a1, ((0, 0), (0, Kp - K9)))                         # (R1, Kp)

    w1m = jnp.pad(w1.reshape(K9, C).astype(jnp.bfloat16),
                  ((0, Kp - K9), (0, 0)))                            # (Kp, C)
    w2m = _build_w2_dense(w2, Ho, Wo).astype(jnp.bfloat16)           # (P*C, P*C)

    # Residual / output: NCHW-flat lane-dense, no transposes (free reshape).
    xr = x_nchw.reshape(N, C * HW)

    # 0/1 expand matrix: channel c -> flat positions [c*HW, (c+1)*HW).
    e = jnp.kron(jnp.eye(C, dtype=jnp.float32),
                 jnp.ones((1, HW), jnp.float32)).astype(jnp.bfloat16)

    kernel = functools.partial(_fused_model_kernel, N=N, H=H, W=W, C=C)
    out = pl.pallas_call(
        kernel,
        out_shape=jax.ShapeDtypeStruct((N, C * HW), x_nchw.dtype),
        grid=(1,),
        in_specs=[
            pl.BlockSpec((R1, Kp), lambda i: (0, 0)),
            pl.BlockSpec((N, C * HW), lambda i: (0, 0)),
            pl.BlockSpec((Kp, C), lambda i: (0, 0)),
            pl.BlockSpec((P * C, P * C), lambda i: (0, 0)),
            pl.BlockSpec((C, C * HW), lambda i: (0, 0)),
            pl.BlockSpec((1, C), lambda i: (0, 0)),
            pl.BlockSpec((1, C), lambda i: (0, 0)),
            pl.BlockSpec((1, C), lambda i: (0, 0)),
            pl.BlockSpec((1, C), lambda i: (0, 0)),
        ],
        out_specs=pl.BlockSpec((N, C * HW), lambda i: (0, 0)),
    )(a1, xr, w1m, w2m, e,
      g1.reshape(1, C), be1.reshape(1, C), g2.reshape(1, C), be2.reshape(1, C))

    return out.reshape(N, C, H, W)                                    # free reshape


# --------------------------------------------------------------------------
# Deterministic parameter init (conv bias kept for PyTorch fidelity; it is
# dead code numerically under train-mode BN) + pure-JAX f32 reference.
# --------------------------------------------------------------------------
def init_block_params(key, C):
    k1, k2, k3, k4 = jax.random.split(key, 4)
    w = 0.05 * jax.random.normal(k1, (3, 3, C, C), jnp.float32)       # HWIO
    b = 0.05 * jax.random.normal(k2, (C,), jnp.float32)
    gamma = 1.0 + 0.1 * jax.random.normal(k3, (C,), jnp.float32)
    beta = 0.1 * jax.random.normal(k4, (C,), jnp.float32)
    return w, b, gamma, beta


def _ref_block(x_nchw, w_hwio, b, gamma, beta):
    w_oihw = jnp.transpose(w_hwio, (3, 2, 0, 1))
    y = jax.lax.conv_general_dilated(
        x_nchw, w_oihw, (1, 1), ((1, 1), (1, 1)),
        dimension_numbers=("NCHW", "OIHW", "NCHW"))
    y = y + b[None, :, None, None]
    mean = jnp.mean(y, axis=(0, 2, 3), keepdims=True)
    var = jnp.mean(jnp.square(y - mean), axis=(0, 2, 3), keepdims=True)
    y = ((y - mean) * jax.lax.rsqrt(var + EPS)
         * gamma[None, :, None, None] + beta[None, :, None, None])
    y = jnp.maximum(y, 0.0)
    N, C, H, W = y.shape
    return y.reshape(N, C, H // 2, 2, W // 2, 2).max(axis=(3, 5))


def _ref_forward(x, params):
    h = _ref_block(x, *params["block1"])
    h = _ref_block(h, *params["block2"])
    return h + x


if __name__ == "__main__":
    key = jax.random.PRNGKey(0)
    kx, k1, k2 = jax.random.split(key, 3)

    N, C, H, W = 2, 64, 4, 4             # smallest config where forward is defined
    x = jax.random.normal(kx, (N, C, H, W), jnp.float32)   # PyTorch-style NCHW

    params = {
        "block1": init_block_params(k1, C),
        "block2": init_block_params(k2, C),
    }

    out = jax.block_until_ready(model_forward(x, params))
    assert out.shape == (N, C, H, W), out.shape

    ref = jax.block_until_ready(_ref_forward(x, params))
    max_err = float(jnp.max(jnp.abs(out - ref)))
    # tolerance accounts for bf16 matmul operands (f32 accumulation)
    assert jnp.allclose(out, ref, rtol=2e-2, atol=5e-2), max_err

    print("KERNEL_OK")
</pallas_src>

<mosaic_0001>
module attributes {stable_mosaic.version = 11 : i64} {
  func.func @_fused_model_kernel(%arg0: i32, %arg1: memref<32x640xbf16, #tpu.memory_space<vmem>>, %arg2: memref<2x1024xf32, #tpu.memory_space<vmem>>, %arg3: memref<640x64xbf16, #tpu.memory_space<vmem>>, %arg4: memref<256x256xbf16, #tpu.memory_space<vmem>>, %arg5: memref<64x1024xbf16, #tpu.memory_space<vmem>>, %arg6: memref<1x64xf32, #tpu.memory_space<vmem>>, %arg7: memref<1x64xf32, #tpu.memory_space<vmem>>, %arg8: memref<1x64xf32, #tpu.memory_space<vmem>>, %arg9: memref<1x64xf32, #tpu.memory_space<vmem>>, %arg10: memref<2x1024xf32, #tpu.memory_space<vmem>>) attributes {dimension_semantics = [#tpu.dimension_semantics<arbitrary>], iteration_bounds = array<i64: 1>, scalar_prefetch = 0 : i64, scratch_operands = 0 : i64, tpu.core_type = #tpu.core_type<tc>, window_params = [{pipeline_mode = #tpu.pipeline_mode<synchronous>, transform_indices = @transform_0, window_bounds = array<i64: 32, 640>}, {pipeline_mode = #tpu.pipeline_mode<synchronous>, transform_indices = @transform_1, window_bounds = array<i64: 2, 1024>}, {pipeline_mode = #tpu.pipeline_mode<synchronous>, transform_indices = @transform_2, window_bounds = array<i64: 640, 64>}, {pipeline_mode = #tpu.pipeline_mode<synchronous>, transform_indices = @transform_3, window_bounds = array<i64: 256, 256>}, {pipeline_mode = #tpu.pipeline_mode<synchronous>, transform_indices = @transform_4, window_bounds = array<i64: 64, 1024>}, {pipeline_mode = #tpu.pipeline_mode<synchronous>, transform_indices = @transform_5, window_bounds = array<i64: 1, 64>}, {pipeline_mode = #tpu.pipeline_mode<synchronous>, transform_indices = @transform_6, window_bounds = array<i64: 1, 64>}, {pipeline_mode = #tpu.pipeline_mode<synchronous>, transform_indices = @transform_7, window_bounds = array<i64: 1, 64>}, {pipeline_mode = #tpu.pipeline_mode<synchronous>, transform_indices = @transform_8, window_bounds = array<i64: 1, 64>}, {pipeline_mode = #tpu.pipeline_mode<synchronous>, transform_indices = @transform_9, window_bounds = array<i64: 2, 1024>}]} {
    %c0 = arith.constant 0 : index
    %c0_0 = arith.constant 0 : index
    %0 = vector.load %arg1[%c0, %c0_0] : memref<32x640xbf16, #tpu.memory_space<vmem>>, vector<32x640xbf16>
    %c0_1 = arith.constant 0 : index
    %c0_2 = arith.constant 0 : index
    %1 = vector.load %arg3[%c0_1, %c0_2] : memref<640x64xbf16, #tpu.memory_space<vmem>>, vector<640x64xbf16>
    %cst = arith.constant dense<0.000000e+00> : vector<32x64xf32>
    %2 = tpu.matmul %0, %1, %cst {dimension_numbers = #tpu.dot_dimension_numbers<[1], [0], [0], [1], [0, 0, 1, 1], [], []>} : vector<32x640xbf16>, vector<640x64xbf16>, vector<32x64xf32> -> vector<32x64xf32>
    %cst_3 = arith.constant dense<0.000000e+00> : vector<64xf32>
    %3 = vector.multi_reduction <add>, %2, %cst_3 [0] : vector<32x64xf32> to vector<64xf32>
    %4 = vector.shape_cast %3 : vector<64xf32> to vector<1x64xf32>
    %cst_4 = arith.constant 3.125000e-02 : f32
    %5 = vector.broadcast %cst_4 : f32 to vector<1x64xf32>
    %6 = arith.mulf %4, %5 : vector<1x64xf32>
    %7 = vector.broadcast %6 : vector<1x64xf32> to vector<32x64xf32>
    %8 = arith.subf %2, %7 : vector<32x64xf32>
    %9 = arith.mulf %8, %8 : vector<32x64xf32>
    %cst_5 = arith.constant dense<0.000000e+00> : vector<64xf32>
    %10 = vector.multi_reduction <add>, %9, %cst_5 [0] : vector<32x64xf32> to vector<64xf32>
    %11 = vector.shape_cast %10 : vector<64xf32> to vector<1x64xf32>
    %cst_6 = arith.constant 3.125000e-02 : f32
    %12 = vector.broadcast %cst_6 : f32 to vector<1x64xf32>
    %13 = arith.mulf %11, %12 : vector<1x64xf32>
    %c0_7 = arith.constant 0 : index
    %c0_8 = arith.constant 0 : index
    %14 = vector.load %arg6[%c0_7, %c0_8] : memref<1x64xf32, #tpu.memory_space<vmem>>, vector<1x64xf32>
    %cst_9 = arith.constant 9.99999974E-6 : f32
    %15 = vector.broadcast %cst_9 : f32 to vector<1x64xf32>
    %16 = arith.addf %13, %15 : vector<1x64xf32>
    %17 = math.rsqrt %16 : vector<1x64xf32>
    %18 = arith.mulf %14, %17 : vector<1x64xf32>
    %19 = vector.broadcast %18 : vector<1x64xf32> to vector<32x64xf32>
    %20 = arith.mulf %8, %19 : vector<32x64xf32>
    %c0_10 = arith.constant 0 : index
    %c0_11 = arith.constant 0 : index
    %21 = vector.load %arg7[%c0_10, %c0_11] : memref<1x64xf32, #tpu.memory_space<vmem>>, vector<1x64xf32>
    %22 = vector.broadcast %21 : vector<1x64xf32> to vector<32x64xf32>
    %23 = arith.addf %20, %22 : vector<32x64xf32>
    %cst_12 = arith.constant 0.000000e+00 : f32
    %24 = vector.broadcast %cst_12 : f32 to vector<32x64xf32>
    %25 = arith.maximumf %23, %24 : vector<32x64xf32>
    %26 = vector.shape_cast %25 : vector<32x64xf32> to vector<4x2x4x64xf32>
    %cst_13 = arith.constant dense<0xFF800000> : vector<4x4x64xf32>
    %27 = vector.multi_reduction <maximumf>, %26, %cst_13 [1] : vector<4x2x4x64xf32> to vector<4x4x64xf32>
    %28 = vector.shape_cast %27 : vector<4x4x64xf32> to vector<8x2x64xf32>
    %cst_14 = arith.constant dense<0xFF800000> : vector<8x64xf32>
    %29 = vector.multi_reduction <maximumf>, %28, %cst_14 [1] : vector<8x2x64xf32> to vector<8x64xf32>
    %30 = vector.shape_cast %29 : vector<8x64xf32> to vector<2x4x64xf32>
    %31 = vector.extract_strided_slice %30 {offsets = [0, 0, 0], sizes = [2, 1, 64], strides = [1, 1, 1]} : vector<2x4x64xf32> to vector<2x1x64xf32>
    %32 = vector.shape_cast %31 : vector<2x1x64xf32> to vector<2x64xf32>
    %33 = vector.extract_strided_slice %30 {offsets = [0, 1, 0], sizes = [2, 1, 64], strides = [1, 1, 1]} : vector<2x4x64xf32> to vector<2x1x64xf32>
    %34 = vector.shape_cast %33 : vector<2x1x64xf32> to vector<2x64xf32>
    %35 = vector.extract_strided_slice %30 {offsets = [0, 2, 0], sizes = [2, 1, 64], strides = [1, 1, 1]} : vector<2x4x64xf32> to vector<2x1x64xf32>
    %36 = vector.shape_cast %35 : vector<2x1x64xf32> to vector<2x64xf32>
    %37 = vector.extract_strided_slice %30 {offsets = [0, 3, 0], sizes = [2, 1, 64], strides = [1, 1, 1]} : vector<2x4x64xf32> to vector<2x1x64xf32>
    %38 = vector.shape_cast %37 : vector<2x1x64xf32> to vector<2x64xf32>
    %39 = tpu.concatenate %32, %34, %36, %38 in 1 : vector<2x64xf32>, vector<2x64xf32>, vector<2x64xf32>, vector<2x64xf32> -> vector<2x256xf32>
    %40 = arith.truncf %39 : vector<2x256xf32> to vector<2x256xbf16>
    %c0_15 = arith.constant 0 : index
    %c0_16 = arith.constant 0 : index
    %41 = vector.load %arg4[%c0_15, %c0_16] : memref<256x256xbf16, #tpu.memory_space<vmem>>, vector<256x256xbf16>
    %cst_17 = arith.constant dense<0.000000e+00> : vector<2x256xf32>
    %42 = tpu.matmul %40, %41, %cst_17 {dimension_numbers = #tpu.dot_dimension_numbers<[1], [0], [0], [1], [0, 0, 1, 1], [], []>} : vector<2x256xbf16>, vector<256x256xbf16>, vector<2x256xf32> -> vector<2x256xf32>
    %43 = tpu.iota {dimensions = array<i32: 0>} : vector<256x64xi32>
    %44 = tpu.iota {dimensions = array<i32: 1>} : vector<256x64xi32>
    %45 = tpu.iota {dimensions = array<i32: 0>} : vector<64x256xi32>
    %46 = tpu.iota {dimensions = array<i32: 1>} : vector<64x256xi32>
    %cst_18 = arith.constant 0.000000e+00 : f32
    %47 = vector.broadcast %cst_18 : f32 to vector<256x64xf32>
    %cst_19 = arith.constant 0.000000e+00 : f32
    %48 = vector.broadcast %cst_19 : f32 to vector<64x256xf32>
    %c0_i32 = arith.constant 0 : i32
    %49 = vector.broadcast %c0_i32 : i32 to vector<256x64xi32>
    %50 = arith.addi %44, %49 : vector<256x64xi32>
    %51 = arith.cmpi eq, %43, %50 : vector<256x64xi32>
    %cst_20 = arith.constant 1.000000e+00 : f32
    %cst_21 = arith.constant 0.000000e+00 : f32
    %52 = vector.broadcast %cst_20 : f32 to vector<256x64xf32>
    %53 = vector.broadcast %cst_21 : f32 to vector<256x64xf32>
    %54 = arith.select %51, %52, %53 : vector<256x64xi1>, vector<256x64xf32>
    %55 = arith.addf %47, %54 : vector<256x64xf32>
    %c0_i32_22 = arith.constant 0 : i32
    %56 = vector.broadcast %c0_i32_22 : i32 to vector<64x256xi32>
    %57 = arith.addi %45, %56 : vector<64x256xi32>
    %58 = arith.cmpi eq, %46, %57 : vector<64x256xi32>
    %cst_23 = arith.constant 1.000000e+00 : f32
    %cst_24 = arith.constant 0.000000e+00 : f32
    %59 = vector.broadcast %cst_23 : f32 to vector<64x256xf32>
    %60 = vector.broadcast %cst_24 : f32 to vector<64x256xf32>
    %61 = arith.select %58, %59, %60 : vector<64x256xi1>, vector<64x256xf32>
    %62 = arith.addf %48, %61 : vector<64x256xf32>
    %c64_i32 = arith.constant 64 : i32
    %63 = vector.broadcast %c64_i32 : i32 to vector<256x64xi32>
    %64 = arith.addi %44, %63 : vector<256x64xi32>
    %65 = arith.cmpi eq, %43, %64 : vector<256x64xi32>
    %cst_25 = arith.constant 1.000000e+00 : f32
    %cst_26 = arith.constant 0.000000e+00 : f32
    %66 = vector.broadcast %cst_25 : f32 to vector<256x64xf32>
    %67 = vector.broadcast %cst_26 : f32 to vector<256x64xf32>
    %68 = arith.select %65, %66, %67 : vector<256x64xi1>, vector<256x64xf32>
    %69 = arith.addf %55, %68 : vector<256x64xf32>
    %c64_i32_27 = arith.constant 64 : i32
    %70 = vector.broadcast %c64_i32_27 : i32 to vector<64x256xi32>
    %71 = arith.addi %45, %70 : vector<64x256xi32>
    %72 = arith.cmpi eq, %46, %71 : vector<64x256xi32>
    %cst_28 = arith.constant 1.000000e+00 : f32
    %cst_29 = arith.constant 0.000000e+00 : f32
    %73 = vector.broadcast %cst_28 : f32 to vector<64x256xf32>
    %74 = vector.broadcast %cst_29 : f32 to vector<64x256xf32>
    %75 = arith.select %72, %73, %74 : vector<64x256xi1>, vector<64x256xf32>
    %76 = arith.addf %62, %75 : vector<64x256xf32>
    %c128_i32 = arith.constant 128 : i32
    %77 = vector.broadcast %c128_i32 : i32 to vector<256x64xi32>
    %78 = arith.addi %44, %77 : vector<256x64xi32>
    %79 = arith.cmpi eq, %43, %78 : vector<256x64xi32>
    %cst_30 = arith.constant 1.000000e+00 : f32
    %cst_31 = arith.constant 0.000000e+00 : f32
    %80 = vector.broadcast %cst_30 : f32 to vector<256x64xf32>
    %81 = vector.broadcast %cst_31 : f32 to vector<256x64xf32>
    %82 = arith.select %79, %80, %81 : vector<256x64xi1>, vector<256x64xf32>
    %83 = arith.addf %69, %82 : vector<256x64xf32>
    %c128_i32_32 = arith.constant 128 : i32
    %84 = vector.broadcast %c128_i32_32 : i32 to vector<64x256xi32>
    %85 = arith.addi %45, %84 : vector<64x256xi32>
    %86 = arith.cmpi eq, %46, %85 : vector<64x256xi32>
    %cst_33 = arith.constant 1.000000e+00 : f32
    %cst_34 = arith.constant 0.000000e+00 : f32
    %87 = vector.broadcast %cst_33 : f32 to vector<64x256xf32>
    %88 = vector.broadcast %cst_34 : f32 to vector<64x256xf32>
    %89 = arith.select %86, %87, %88 : vector<64x256xi1>, vector<64x256xf32>
    %90 = arith.addf %76, %89 : vector<64x256xf32>
    %c192_i32 = arith.constant 192 : i32
    %91 = vector.broadcast %c192_i32 : i32 to vector<256x64xi32>
    %92 = arith.addi %44, %91 : vector<256x64xi32>
    %93 = arith.cmpi eq, %43, %92 : vector<256x64xi32>
    %cst_35 = arith.constant 1.000000e+00 : f32
    %cst_36 = arith.constant 0.000000e+00 : f32
    %94 = vector.broadcast %cst_35 : f32 to vector<256x64xf32>
    %95 = vector.broadcast %cst_36 : f32 to vector<256x64xf32>
    %96 = arith.select %93, %94, %95 : vector<256x64xi1>, vector<256x64xf32>
    %97 = arith.addf %83, %96 : vector<256x64xf32>
    %c192_i32_37 = arith.constant 192 : i32
    %98 = vector.broadcast %c192_i32_37 : i32 to vector<64x256xi32>
    %99 = arith.addi %45, %98 : vector<64x256xi32>
    %100 = arith.cmpi eq, %46, %99 : vector<64x256xi32>
    %cst_38 = arith.constant 1.000000e+00 : f32
    %cst_39 = arith.constant 0.000000e+00 : f32
    %101 = vector.broadcast %cst_38 : f32 to vector<64x256xf32>
    %102 = vector.broadcast %cst_39 : f32 to vector<64x256xf32>
    %103 = arith.select %100, %101, %102 : vector<64x256xi1>, vector<64x256xf32>
    %104 = arith.addf %90, %103 : vector<64x256xf32>
    %cst_40 = arith.constant dense<0.000000e+00> : vector<256xf32>
    %105 = vector.multi_reduction <add>, %42, %cst_40 [0] : vector<2x256xf32> to vector<256xf32>
    %106 = vector.shape_cast %105 : vector<256xf32> to vector<1x256xf32>
    %cst_41 = arith.constant dense<0.000000e+00> : vector<1x64xf32>
    %107 = tpu.matmul %106, %97, %cst_41 {dimension_numbers = #tpu.dot_dimension_numbers<[1], [0], [0], [1], [0, 0, 1, 1], [], []>} : vector<1x256xf32>, vector<256x64xf32>, vector<1x64xf32> -> vector<1x64xf32>
    %cst_42 = arith.constant 1.250000e-01 : f32
    %108 = vector.broadcast %cst_42 : f32 to vector<1x64xf32>
    %109 = arith.mulf %107, %108 : vector<1x64xf32>
    %cst_43 = arith.constant dense<0.000000e+00> : vector<1x256xf32>
    %110 = tpu.matmul %109, %104, %cst_43 {dimension_numbers = #tpu.dot_dimension_numbers<[1], [0], [0], [1], [0, 0, 1, 1], [], []>} : vector<1x64xf32>, vector<64x256xf32>, vector<1x256xf32> -> vector<1x256xf32>
    %111 = vector.broadcast %110 : vector<1x256xf32> to vector<2x256xf32>
    %112 = arith.subf %42, %111 : vector<2x256xf32>
    %113 = arith.mulf %112, %112 : vector<2x256xf32>
    %cst_44 = arith.constant dense<0.000000e+00> : vector<256xf32>
    %114 = vector.multi_reduction <add>, %113, %cst_44 [0] : vector<2x256xf32> to vector<256xf32>
    %115 = vector.shape_cast %114 : vector<256xf32> to vector<1x256xf32>
    %cst_45 = arith.constant dense<0.000000e+00> : vector<1x64xf32>
    %116 = tpu.matmul %115, %97, %cst_45 {dimension_numbers = #tpu.dot_dimension_numbers<[1], [0], [0], [1], [0, 0, 1, 1], [], []>} : vector<1x256xf32>, vector<256x64xf32>, vector<1x64xf32> -> vector<1x64xf32>
    %cst_46 = arith.constant 1.250000e-01 : f32
    %117 = vector.broadcast %cst_46 : f32 to vector<1x64xf32>
    %118 = arith.mulf %116, %117 : vector<1x64xf32>
    %c0_47 = arith.constant 0 : index
    %c0_48 = arith.constant 0 : index
    %119 = vector.load %arg8[%c0_47, %c0_48] : memref<1x64xf32, #tpu.memory_space<vmem>>, vector<1x64xf32>
    %cst_49 = arith.constant 9.99999974E-6 : f32
    %120 = vector.broadcast %cst_49 : f32 to vector<1x64xf32>
    %121 = arith.addf %118, %120 : vector<1x64xf32>
    %122 = math.rsqrt %121 : vector<1x64xf32>
    %123 = arith.mulf %119, %122 : vector<1x64xf32>
    %cst_50 = arith.constant dense<0.000000e+00> : vector<1x256xf32>
    %124 = tpu.matmul %123, %104, %cst_50 {dimension_numbers = #tpu.dot_dimension_numbers<[1], [0], [0], [1], [0, 0, 1, 1], [], []>} : vector<1x64xf32>, vector<64x256xf32>, vector<1x256xf32> -> vector<1x256xf32>
    %c0_51 = arith.constant 0 : index
    %c0_52 = arith.constant 0 : index
    %125 = vector.load %arg9[%c0_51, %c0_52] : memref<1x64xf32, #tpu.memory_space<vmem>>, vector<1x64xf32>
    %cst_53 = arith.constant dense<0.000000e+00> : vector<1x256xf32>
    %126 = tpu.matmul %125, %104, %cst_53 {dimension_numbers = #tpu.dot_dimension_numbers<[1], [0], [0], [1], [0, 0, 1, 1], [], []>} : vector<1x64xf32>, vector<64x256xf32>, vector<1x256xf32> -> vector<1x256xf32>
    %127 = vector.broadcast %124 : vector<1x256xf32> to vector<2x256xf32>
    %128 = arith.mulf %112, %127 : vector<2x256xf32>
    %129 = vector.broadcast %126 : vector<1x256xf32> to vector<2x256xf32>
    %130 = arith.addf %128, %129 : vector<2x256xf32>
    %cst_54 = arith.constant 0.000000e+00 : f32
    %131 = vector.broadcast %cst_54 : f32 to vector<2x256xf32>
    %132 = arith.maximumf %130, %131 : vector<2x256xf32>
    %133 = vector.extract_strided_slice %132 {offsets = [0, 0], sizes = [2, 128], strides = [1, 1]} : vector<2x256xf32> to vector<2x128xf32>
    %134 = vector.extract_strided_slice %132 {offsets = [0, 128], sizes = [2, 128], strides = [1, 1]} : vector<2x256xf32> to vector<2x128xf32>
    %135 = arith.maximumf %133, %134 : vector<2x128xf32>
    %136 = vector.extract_strided_slice %135 {offsets = [0, 0], sizes = [2, 64], strides = [1, 1]} : vector<2x128xf32> to vector<2x64xf32>
    %137 = vector.extract_strided_slice %135 {offsets = [0, 64], sizes = [2, 64], strides = [1, 1]} : vector<2x128xf32> to vector<2x64xf32>
    %138 = arith.maximumf %136, %137 : vector<2x64xf32>
    %139 = arith.truncf %138 : vector<2x64xf32> to vector<2x64xbf16>
    %c0_55 = arith.constant 0 : index
    %c0_56 = arith.constant 0 : index
    %140 = vector.load %arg5[%c0_55, %c0_56] : memref<64x1024xbf16, #tpu.memory_space<vmem>>, vector<64x1024xbf16>
    %cst_57 = arith.constant dense<0.000000e+00> : vector<2x1024xf32>
    %141 = tpu.matmul %139, %140, %cst_57 {dimension_numbers = #tpu.dot_dimension_numbers<[1], [0], [0], [1], [0, 0, 1, 1], [], []>} : vector<2x64xbf16>, vector<64x1024xbf16>, vector<2x1024xf32> -> vector<2x1024xf32>
    %c0_58 = arith.constant 0 : index
    %c0_59 = arith.constant 0 : index
    %142 = vector.load %arg2[%c0_58, %c0_59] : memref<2x1024xf32, #tpu.memory_space<vmem>>, vector<2x1024xf32>
    %143 = arith.addf %142, %141 : vector<2x1024xf32>
    %c0_60 = arith.constant 0 : index
    %c0_61 = arith.constant 0 : index
    %144 = vector.load %arg10[%c0_60, %c0_61] : memref<2x1024xf32, #tpu.memory_space<vmem>>, vector<2x1024xf32>
    tpu.vector_store %arg10[%c0_60, %c0_61], %143 {strides = array<i32>} : memref<2x1024xf32, #tpu.memory_space<vmem>>, vector<2x1024xf32>,
    return
  }
  func.func @transform_0(%arg0: i32) -> (i32, i32) {
    %c0_i32 = arith.constant 0 : i32
    %c0_i32_0 = arith.constant 0 : i32
    %c0_i32_1 = arith.constant 0 : i32
    return %c0_i32, %c0_i32_0 : i32, i32
  }
  func.func @transform_1(%arg0: i32) -> (i32, i32) {
    %c0_i32 = arith.constant 0 : i32
    %c0_i32_0 = arith.constant 0 : i32
    %c0_i32_1 = arith.constant 0 : i32
    return %c0_i32, %c0_i32_0 : i32, i32
  }
  func.func @transform_2(%arg0: i32) -> (i32, i32) {
    %c0_i32 = arith.constant 0 : i32
    %c0_i32_0 = arith.constant 0 : i32
    %c0_i32_1 = arith.constant 0 : i32
    return %c0_i32, %c0_i32_0 : i32, i32
  }
  func.func @transform_3(%arg0: i32) -> (i32, i32) {
    %c0_i32 = arith.constant 0 : i32
    %c0_i32_0 = arith.constant 0 : i32
    %c0_i32_1 = arith.constant 0 : i32
    return %c0_i32, %c0_i32_0 : i32, i32
  }
  func.func @transform_4(%arg0: i32) -> (i32, i32) {
    %c0_i32 = arith.constant 0 : i32
    %c0_i32_0 = arith.constant 0 : i32
    %c0_i32_1 = arith.constant 0 : i32
    return %c0_i32, %c0_i32_0 : i32, i32
  }
  func.func @transform_5(%arg0: i32) -> (i32, i32) {
    %c0_i32 = arith.constant 0 : i32
    %c0_i32_0 = arith.constant 0 : i32
    %c0_i32_1 = arith.constant 0 : i32
    return %c0_i32, %c0_i32_0 : i32, i32
  }
  func.func @transform_6(%arg0: i32) -> (i32, i32) {
    %c0_i32 = arith.constant 0 : i32
    %c0_i32_0 = arith.constant 0 : i32
    %c0_i32_1 = arith.constant 0 : i32
    return %c0_i32, %c0_i32_0 : i32, i32
  }
  func.func @transform_7(%arg0: i32) -> (i32, i32) {
    %c0_i32 = arith.constant 0 : i32
    %c0_i32_0 = arith.constant 0 : i32
    %c0_i32_1 = arith.constant 0 : i32
    return %c0_i32, %c0_i32_0 : i32, i32
  }
  func.func @transform_8(%arg0: i32) -> (i32, i32) {
    %c0_i32 = arith.constant 0 : i32
    %c0_i32_0 = arith.constant 0 : i32
    %c0_i32_1 = arith.constant 0 : i32
    return %c0_i32, %c0_i32_0 : i32, i32
  }
  func.func @transform_9(%arg0: i32) -> (i32, i32) {
    %c0_i32 = arith.constant 0 : i32
    %c0_i32_0 = arith.constant 0 : i32
    %c0_i32_1 = arith.constant 0 : i32
    return %c0_i32, %c0_i32_0 : i32, i32
  }
}

</mosaic_0001>

<llo_original>
// kernel: model_forward.1
$region0: #{model_forward.1}
  #allocation0 [shape = 'u32[]', space=smem, size = 0x4, offset = 0x4, fixed_abs, tag = 'smem constant byte address 0x4 - core index']
  #allocation1 [shape = 'u32[144,128]{1,0:T(1,128)}', space=vmem, size = 0x12000, scoped, tag = 'internal scratch']
  %s0 = inlined_call_operand.vmem [shape: bf16[32,640], index: 0, kind: input, shape index: {}]
  %s1 = inlined_call_operand.vmem [shape: f32[2,1024], index: 1, kind: input, shape index: {}]
  %s2 = inlined_call_operand.vmem [shape: bf16[640,64], index: 2, kind: input, shape index: {}]
  %s3 = inlined_call_operand.vmem [shape: bf16[256,256], index: 3, kind: input, shape index: {}]
  %s4 = inlined_call_operand.vmem [shape: bf16[64,1024], index: 4, kind: input, shape index: {}]
  %s5 = inlined_call_operand.vmem [shape: f32[1,64], index: 5, kind: input, shape index: {}]
  %s6 = inlined_call_operand.vmem [shape: f32[1,64], index: 6, kind: input, shape index: {}]
  %s7 = inlined_call_operand.vmem [shape: f32[1,64], index: 7, kind: input, shape index: {}]
  %s8 = inlined_call_operand.vmem [shape: f32[1,64], index: 8, kind: input, shape index: {}]
  %s9 = inlined_call_operand.vmem [shape: f32[2,1024], index: 9, kind: output, shape index: {}]
  %s10 = sld [smem:[#allocation0]]
  $region46: #{model_forward.1} parent=0
    _
  %s12 = ssub.s32 1, %s10
  %s13 = scalar_select 0, %s12, %s10
  // Predicated region
  $region2: #{model_forward.1} parent=0 // pred_check
    _
  $region3: #{model_forward.1} parent=0 // pred_check_branch
    %15 = sbr.rel (0) target = $region5
  $region4: #{model_forward.1} parent=0 // pred_region
    _
  $region5: #{model_forward.1} parent=0 // pred_fallthru
    _
  // Predicated region
  $region6: #{model_forward.1} parent=0 // pred_check
    _
  $region7: #{model_forward.1} parent=0 // pred_check_branch
    %17 = sbr.rel (0) target = $region9
  $region8: #{model_forward.1} parent=0 // pred_region
    _
  $region9: #{model_forward.1} parent=0 // pred_fallthru
    _
  // Predicated region
  $region10: #{model_forward.1} parent=0 // pred_check
    _
  $region11: #{model_forward.1} parent=0 // pred_check_branch
    %19 = sbr.rel (0) target = $region13
  $region12: #{model_forward.1} parent=0 // pred_region
    _
  $region13: #{model_forward.1} parent=0 // pred_fallthru
    _
  // Predicated region
  $region14: #{model_forward.1} parent=0 // pred_check
    _
  $region15: #{model_forward.1} parent=0 // pred_check_branch
    %21 = sbr.rel (0) target = $region17
  $region16: #{model_forward.1} parent=0 // pred_region
    _
  $region17: #{model_forward.1} parent=0 // pred_fallthru
    _
  // Predicated region
  $region18: #{model_forward.1} parent=0 // pred_check
    _
  $region19: #{model_forward.1} parent=0 // pred_check_branch
    %23 = sbr.rel (0) target = $region21
  $region20: #{model_forward.1} parent=0 // pred_region
    _
  $region21: #{model_forward.1} parent=0 // pred_fallthru
    _
  // Predicated region
  $region22: #{model_forward.1} parent=0 // pred_check
    _
  $region23: #{model_forward.1} parent=0 // pred_check_branch
    %25 = sbr.rel (0) target = $region25
  $region24: #{model_forward.1} parent=0 // pred_region
    _
  $region25: #{model_forward.1} parent=0 // pred_fallthru
    _
  // Predicated region
  $region26: #{model_forward.1} parent=0 // pred_check
    _
  $region27: #{model_forward.1} parent=0 // pred_check_branch
    %27 = sbr.rel (0) target = $region29
  $region28: #{model_forward.1} parent=0 // pred_region
    _
  $region29: #{model_forward.1} parent=0 // pred_fallthru
    _
  // Predicated region
  $region30: #{model_forward.1} parent=0 // pred_check
    _
  $region31: #{model_forward.1} parent=0 // pred_check_branch
    %29 = sbr.rel (0) target = $region33
  $region32: #{model_forward.1} parent=0 // pred_region
    _
  $region33: #{model_forward.1} parent=0 // pred_fallthru
    _
  // Predicated region
  $region34: #{model_forward.1} parent=0 // pred_check
    _
  $region35: #{model_forward.1} parent=0 // pred_check_branch
    %31 = sbr.rel (0) target = $region37
  $region36: #{model_forward.1} parent=0 // pred_region
    _
  $region37: #{model_forward.1} parent=0 // pred_fallthru
    _
  %v33 = vld [vmem:[%s0] sm:$0xff]
  %v34 = vld [vmem:[%s0 + $0x8] sm:$0xff]
  %v35 = vld [vmem:[%s0 + $0x10] sm:$0xf]
  %v36 = vld [vmem:[%s0 + $0x14] sm:$0xff]
  %v37 = vld [vmem:[%s0 + $0x1c] sm:$0xff]
  %v38 = vld [vmem:[%s0 + $0x24] sm:$0xf]
  %v39 = vld [vmem:[%s0 + $0x28] sm:$0xff]
  %v40 = vld [vmem:[%s0 + $0x30] sm:$0xff]
  %v41 = vld [vmem:[%s0 + $0x38] sm:$0xf]
  %v42 = vld [vmem:[%s0 + $0x3c] sm:$0xff]
  %v43 = vld [vmem:[%s0 + $0x44] sm:$0xff]
  %v44 = vld [vmem:[%s0 + $0x4c] sm:$0xf]
  %v45 = vld [vmem:[%s2] sm:$0xf]
  %v46 = vld [vmem:[%s2 + $0x4] sm:$0xf]
  %v47 = vld [vmem:[%s2 + $0x8] sm:$0xf]
  %v48 = vld [vmem:[%s2 + $0xc] sm:$0xf]
  %v49 = vld [vmem:[%s2 + $0x10] sm:$0xf]
  %v50 = vld [vmem:[%s2 + $0x14] sm:$0xf]
  %v51 = vld [vmem:[%s2 + $0x18] sm:$0xf]
  %v52 = vld [vmem:[%s2 + $0x1c] sm:$0xf]
  %v53 = vld [vmem:[%s2 + $0x20] sm:$0xf]
  %v54 = vld [vmem:[%s2 + $0x24] sm:$0xf]
  %v55 = vld [vmem:[%s2 + $0x28] sm:$0xf]
  %v56 = vld [vmem:[%s2 + $0x2c] sm:$0xf]
  %v57 = vld [vmem:[%s2 + $0x30] sm:$0xf]
  %v58 = vld [vmem:[%s2 + $0x34] sm:$0xf]
  %v59 = vld [vmem:[%s2 + $0x38] sm:$0xf]
  %v60 = vld [vmem:[%s2 + $0x3c] sm:$0xf]
  %v61 = vld [vmem:[%s2 + $0x40] sm:$0xf]
  %v62 = vld [vmem:[%s2 + $0x44] sm:$0xf]
  %v63 = vld [vmem:[%s2 + $0x48] sm:$0xf]
  %v64 = vld [vmem:[%s2 + $0x4c] sm:$0xf]
  %v65 = vld [vmem:[%s2 + $0x50] sm:$0xf]
  %v66 = vld [vmem:[%s2 + $0x54] sm:$0xf]
  %v67 = vld [vmem:[%s2 + $0x58] sm:$0xf]
  %v68 = vld [vmem:[%s2 + $0x5c] sm:$0xf]
  %v69 = vld [vmem:[%s2 + $0x60] sm:$0xf]
  %v70 = vld [vmem:[%s2 + $0x64] sm:$0xf]
  %v71 = vld [vmem:[%s2 + $0x68] sm:$0xf]
  %v72 = vld [vmem:[%s2 + $0x6c] sm:$0xf]
  %v73 = vld [vmem:[%s2 + $0x70] sm:$0xf]
  %v74 = vld [vmem:[%s2 + $0x74] sm:$0xf]
  %v75 = vld [vmem:[%s2 + $0x78] sm:$0xf]
  %v76 = vld [vmem:[%s2 + $0x7c] sm:$0xf]
  %v77 = vld [vmem:[%s2 + $0x80] sm:$0xf]
  %v78 = vld [vmem:[%s2 + $0x84] sm:$0xf]
  %v79 = vld [vmem:[%s2 + $0x88] sm:$0xf]
  %v80 = vld [vmem:[%s2 + $0x8c] sm:$0xf]
  %v81 = vld [vmem:[%s2 + $0x90] sm:$0xf]
  %v82 = vld [vmem:[%s2 + $0x94] sm:$0xf]
  %v83 = vld [vmem:[%s2 + $0x98] sm:$0xf]
  %v84 = vld [vmem:[%s2 + $0x9c] sm:$0xf]
  %v85 = vld [vmem:[%s2 + $0xa0] sm:$0xf]
  %v86 = vld [vmem:[%s2 + $0xa4] sm:$0xf]
  %v87 = vld [vmem:[%s2 + $0xa8] sm:$0xf]
  %v88 = vld [vmem:[%s2 + $0xac] sm:$0xf]
  %v89 = vld [vmem:[%s2 + $0xb0] sm:$0xf]
  %v90 = vld [vmem:[%s2 + $0xb4] sm:$0xf]
  %v91 = vld [vmem:[%s2 + $0xb8] sm:$0xf]
  %v92 = vld [vmem:[%s2 + $0xbc] sm:$0xf]
  %v93 = vld [vmem:[%s2 + $0xc0] sm:$0xf]
  %v94 = vld [vmem:[%s2 + $0xc4] sm:$0xf]
  %v95 = vld [vmem:[%s2 + $0xc8] sm:$0xf]
  %v96 = vld [vmem:[%s2 + $0xcc] sm:$0xf]
  %v97 = vld [vmem:[%s2 + $0xd0] sm:$0xf]
  %v98 = vld [vmem:[%s2 + $0xd4] sm:$0xf]
  %v99 = vld [vmem:[%s2 + $0xd8] sm:$0xf]
  %v100 = vld [vmem:[%s2 + $0xdc] sm:$0xf]
  %v101 = vld [vmem:[%s2 + $0xe0] sm:$0xf]
  %v102 = vld [vmem:[%s2 + $0xe4] sm:$0xf]
  %v103 = vld [vmem:[%s2 + $0xe8] sm:$0xf]
  %v104 = vld [vmem:[%s2 + $0xec] sm:$0xf]
  %v105 = vld [vmem:[%s2 + $0xf0] sm:$0xf]
  %v106 = vld [vmem:[%s2 + $0xf4] sm:$0xf]
  %v107 = vld [vmem:[%s2 + $0xf8] sm:$0xf]
  %v108 = vld [vmem:[%s2 + $0xfc] sm:$0xf]
  %v109 = vld [vmem:[%s2 + $0x100] sm:$0xf]
  %v110 = vld [vmem:[%s2 + $0x104] sm:$0xf]
  %v111 = vld [vmem:[%s2 + $0x108] sm:$0xf]
  %v112 = vld [vmem:[%s2 + $0x10c] sm:$0xf]
  %v113 = vld [vmem:[%s2 + $0x110] sm:$0xf]
  %v114 = vld [vmem:[%s2 + $0x114] sm:$0xf]
  %v115 = vld [vmem:[%s2 + $0x118] sm:$0xf]
  %v116 = vld [vmem:[%s2 + $0x11c] sm:$0xf]
  %v117 = vld [vmem:[%s2 + $0x120] sm:$0xf]
  %v118 = vld [vmem:[%s2 + $0x124] sm:$0xf]
  %v119 = vld [vmem:[%s2 + $0x128] sm:$0xf]
  %v120 = vld [vmem:[%s2 + $0x12c] sm:$0xf]
  %v121 = vld [vmem:[%s2 + $0x130] sm:$0xf]
  %v122 = vld [vmem:[%s2 + $0x134] sm:$0xf]
  %v123 = vld [vmem:[%s2 + $0x138] sm:$0xf]
  %v124 = vld [vmem:[%s2 + $0x13c] sm:$0xf]
  %v137 = vunpack.c.l.b16 %v33
  %v138 = vunpack.c.h.b16 %v33
  %v139 = vunpack.c.l.b16 %v34
  %v140 = vunpack.c.h.b16 %v34
  %v141 = vunpack.c.l.b16 %v35
  %v142 = vunpack.c.l.b16 %v36
  %v143 = vunpack.c.h.b16 %v36
  %v144 = vunpack.c.l.b16 %v37
  %v145 = vunpack.c.h.b16 %v37
  %v146 = vunpack.c.l.b16 %v38
  %v147 = vunpack.c.l.b16 %v39
  %v148 = vunpack.c.h.b16 %v39
  %v149 = vunpack.c.l.b16 %v40
  %v150 = vunpack.c.h.b16 %v40
  %v151 = vunpack.c.l.b16 %v41
  %v152 = vunpack.c.l.b16 %v42
  %v153 = vunpack.c.h.b16 %v42
  %v154 = vunpack.c.l.b16 %v43
  %v155 = vunpack.c.h.b16 %v43
  %v156 = vunpack.c.l.b16 %v44
  %v157 = vpack.c.b16 %v142, %v137
  %v158 = vpack.c.b16 %v143, %v138
  %v159 = vpack.c.b16 %v144, %v139
  %v160 = vpack.c.b16 %v145, %v140
  %v161 = vpack.c.b16 %v146, %v141
  %v162 = vpack.c.b16 %v152, %v147
  %v163 = vpack.c.b16 %v153, %v148
  %v164 = vpack.c.b16 %v154, %v149
  %v165 = vpack.c.b16 %v155, %v150
  %v166 = vpack.c.b16 %v156, %v151
  %v257 = vunpack.c.l.b16 %v45
  %v258 = vunpack.c.l.b16 %v46
  %v259 = vunpack.c.l.b16 %v47
  %v260 = vunpack.c.l.b16 %v48
  %v261 = vunpack.c.l.b16 %v49
  %v262 = vunpack.c.l.b16 %v50
  %v263 = vunpack.c.l.b16 %v51
  %v264 = vunpack.c.l.b16 %v52
  %v265 = vunpack.c.l.b16 %v53
  %v266 = vunpack.c.l.b16 %v54
  %v267 = vunpack.c.l.b16 %v55
  %v268 = vunpack.c.l.b16 %v56
  %v269 = vunpack.c.l.b16 %v57
  %v270 = vunpack.c.l.b16 %v58
  %v271 = vunpack.c.l.b16 %v59
  %v272 = vunpack.c.l.b16 %v60
  %v273 = vunpack.c.l.b16 %v61
  %v274 = vunpack.c.l.b16 %v62
  %v275 = vunpack.c.l.b16 %v63
  %v276 = vunpack.c.l.b16 %v64
  %v277 = vunpack.c.l.b16 %v65
  %v278 = vunpack.c.l.b16 %v66
  %v279 = vunpack.c.l.b16 %v67
  %v280 = vunpack.c.l.b16 %v68
  %v281 = vunpack.c.l.b16 %v69
  %v282 = vunpack.c.l.b16 %v70
  %v283 = vunpack.c.l.b16 %v71
  %v284 = vunpack.c.l.b16 %v72
  %v285 = vunpack.c.l.b16 %v73
  %v286 = vunpack.c.l.b16 %v74
  %v287 = vunpack.c.l.b16 %v75
  %v288 = vunpack.c.l.b16 %v76
  %v289 = vunpack.c.l.b16 %v77
  %v290 = vunpack.c.l.b16 %v78
  %v291 = vunpack.c.l.b16 %v79
  %v292 = vunpack.c.l.b16 %v80
  %v293 = vunpack.c.l.b16 %v81
  %v294 = vunpack.c.l.b16 %v82
  %v295 = vunpack.c.l.b16 %v83
  %v296 = vunpack.c.l.b16 %v84
  %v297 = vunpack.c.l.b16 %v85
  %v298 = vunpack.c.l.b16 %v86
  %v299 = vunpack.c.l.b16 %v87
  %v300 = vunpack.c.l.b16 %v88
  %v301 = vunpack.c.l.b16 %v89
  %v302 = vunpack.c.l.b16 %v90
  %v303 = vunpack.c.l.b16 %v91
  %v304 = vunpack.c.l.b16 %v92
  %v305 = vunpack.c.l.b16 %v93
  %v306 = vunpack.c.l.b16 %v94
  %v307 = vunpack.c.l.b16 %v95
  %v308 = vunpack.c.l.b16 %v96
  %v309 = vunpack.c.l.b16 %v97
  %v310 = vunpack.c.l.b16 %v98
  %v311 = vunpack.c.l.b16 %v99
  %v312 = vunpack.c.l.b16 %v100
  %v313 = vunpack.c.l.b16 %v101
  %v314 = vunpack.c.l.b16 %v102
  %v315 = vunpack.c.l.b16 %v103
  %v316 = vunpack.c.l.b16 %v104
  %v317 = vunpack.c.l.b16 %v105
  %v318 = vunpack.c.l.b16 %v106
  %v319 = vunpack.c.l.b16 %v107
  %v320 = vunpack.c.l.b16 %v108
  %v321 = vunpack.c.l.b16 %v109
  %v322 = vunpack.c.l.b16 %v110
  %v323 = vunpack.c.l.b16 %v111
  %v324 = vunpack.c.l.b16 %v112
  %v325 = vunpack.c.l.b16 %v113
  %v326 = vunpack.c.l.b16 %v114
  %v327 = vunpack.c.l.b16 %v115
  %v328 = vunpack.c.l.b16 %v116
  %v329 = vunpack.c.l.b16 %v117
  %v330 = vunpack.c.l.b16 %v118
  %v331 = vunpack.c.l.b16 %v119
  %v332 = vunpack.c.l.b16 %v120
  %v333 = vunpack.c.l.b16 %v121
  %v334 = vunpack.c.l.b16 %v122
  %v335 = vunpack.c.l.b16 %v123
  %v336 = vunpack.c.l.b16 %v124
  %v337 = vpack.c.b16 %v258, %v257
  %v338 = vpack.c.b16 %v260, %v259
  %v339 = vpack.c.b16 %v262, %v261
  %v340 = vpack.c.b16 %v264, %v263
  %v341 = vpack.c.b16 %v266, %v265
  %v342 = vpack.c.b16 %v268, %v267
  %v343 = vpack.c.b16 %v270, %v269
  %v344 = vpack.c.b16 %v272, %v271
  %v345 = vpack.c.b16 %v274, %v273
  %v346 = vpack.c.b16 %v276, %v275
  %v347 = vpack.c.b16 %v278, %v277
  %v348 = vpack.c.b16 %v280, %v279
  %v349 = vpack.c.b16 %v282, %v281
  %v350 = vpack.c.b16 %v284, %v283
  %v351 = vpack.c.b16 %v286, %v285
  %v352 = vpack.c.b16 %v288, %v287
  %v353 = vpack.c.b16 %v290, %v289
  %v354 = vpack.c.b16 %v292, %v291
  %v355 = vpack.c.b16 %v294, %v293
  %v356 = vpack.c.b16 %v296, %v295
  %v357 = vpack.c.b16 %v298, %v297
  %v358 = vpack.c.b16 %v300, %v299
  %v359 = vpack.c.b16 %v302, %v301
  %v360 = vpack.c.b16 %v304, %v303
  %v361 = vpack.c.b16 %v306, %v305
  %v362 = vpack.c.b16 %v308, %v307
  %v363 = vpack.c.b16 %v310, %v309
  %v364 = vpack.c.b16 %v312, %v311
  %v365 = vpack.c.b16 %v314, %v313
  %v366 = vpack.c.b16 %v316, %v315
  %v367 = vpack.c.b16 %v318, %v317
  %v368 = vpack.c.b16 %v320, %v319
  %v369 = vpack.c.b16 %v322, %v321
  %v370 = vpack.c.b16 %v324, %v323
  %v371 = vpack.c.b16 %v326, %v325
  %v372 = vpack.c.b16 %v328, %v327
  %v373 = vpack.c.b16 %v330, %v329
  %v374 = vpack.c.b16 %v332, %v331
  %v375 = vpack.c.b16 %v334, %v333
  %v376 = vpack.c.b16 %v336, %v335
  %417 = vmatprep.subr.bf16.mxu0 0
  %418 = vmatpush1.bf16.msra.mxu0 %v337
  %419 = vmatprep.subr.bf16.mxu0 0
  %420 = vmatpush1.bf16.msra.mxu0 %v338
  %421 = vmatprep.subr.bf16.mxu0 0
  %422 = vmatpush1.bf16.msra.mxu0 %v339
  %423 = vmatprep.subr.bf16.mxu0 0
  %424 = vmatpush1.bf16.msra.mxu0 %v340
  %425 = vmatprep.subr.bf16.mxu0 0
  %426 = vmatpush1.bf16.msra.mxu0 %v341
  %427 = vmatprep.subr.bf16.mxu0 0
  %428 = vmatpush1.bf16.msra.mxu0 %v342
  %429 = vmatprep.subr.bf16.mxu0 0
  %430 = vmatpush1.bf16.msra.mxu0 %v343
  %431 = vmatprep.subr.bf16.mxu0 0
  %432 = vmatpush1.bf16.msra.mxu0 %v344
  %433 = vmatprep.subr.bf16.mxu0 0
  %434 = vmatpush1.bf16.msra.mxu0 %v345
  %435 = vmatprep.subr.bf16.mxu0 0
  %436 = vmatpush1.bf16.msra.mxu0 %v346
  %437 = vmatprep.subr.bf16.mxu0 0
  %438 = vmatpush1.bf16.msra.mxu0 %v347
  %439 = vmatprep.subr.bf16.mxu0 0
  %440 = vmatpush1.bf16.msra.mxu0 %v348
  %441 = vmatprep.subr.bf16.mxu0 0
  %442 = vmatpush1.bf16.msra.mxu0 %v349
  %443 = vmatprep.subr.bf16.mxu0 0
  %444 = vmatpush1.bf16.msra.mxu0 %v350
  %445 = vmatprep.subr.bf16.mxu0 0
  %446 = vmatpush1.bf16.msra.mxu0 %v351
  %447 = vmatprep.subr.bf16.mxu0 0
  %448 = vmatpush1.bf16.msra.mxu0 %v352
  %449 = vmatprep.mubr.bf16.mxu0 %v158
  %450 = vmatmul.mubr.bf16.gmra.mrb[0].mxu0 %v157
  %v451 = vpop.f32.mrb[0].mxu0
  %v452 = vadd.f32 0.0, %v451
  %v453 = vpop.f32.mrb[0].mxu0
  %v454 = vpop.f32.mrb[0].mxu0
  %v455 = vadd.f32 0.0, %v454
  %v456 = vpop.f32.mrb[0].mxu0
  %457 = vmatprep.mubr.bf16.mxu0 %v163
  %458 = vmatmul.mubr.bf16.gmra.mrb[0].mxu0 %v162
  %v459 = vpop.f32.mrb[0].mxu0
  %v460 = vadd.f32 0.0, %v459
  %v461 = vpop.f32.mrb[0].mxu0
  %v462 = vpop.f32.mrb[0].mxu0
  %v463 = vadd.f32 0.0, %v462
  %v464 = vpop.f32.mrb[0].mxu0
  %465 = vdwg.mxu0
  %466 = vmatprep.subr.bf16.mxu0 0
  %467 = vmatpush1.bf16.msra.mxu0 %v353
  %468 = vmatprep.subr.bf16.mxu0 0
  %469 = vmatpush1.bf16.msra.mxu0 %v354
  %470 = vmatprep.subr.bf16.mxu0 0
  %471 = vmatpush1.bf16.msra.mxu0 %v355
  %472 = vmatprep.subr.bf16.mxu0 0
  %473 = vmatpush1.bf16.msra.mxu0 %v356
  %474 = vmatprep.subr.bf16.mxu0 0
  %475 = vmatpush1.bf16.msra.mxu0 %v357
  %476 = vmatprep.subr.bf16.mxu0 0
  %477 = vmatpush1.bf16.msra.mxu0 %v358
  %478 = vmatprep.subr.bf16.mxu0 0
  %479 = vmatpush1.bf16.msra.mxu0 %v359
  %480 = vmatprep.subr.bf16.mxu0 0
  %481 = vmatpush1.bf16.msra.mxu0 %v360
  %482 = vmatprep.subr.bf16.mxu0 0
  %483 = vmatpush1.bf16.msra.mxu0 %v361
  %484 = vmatprep.subr.bf16.mxu0 0
  %485 = vmatpush1.bf16.msra.mxu0 %v362
  %486 = vmatprep.subr.bf16.mxu0 0
  %487 = vmatpush1.bf16.msra.mxu0 %v363
  %488 = vmatprep.subr.bf16.mxu0 0
  %489 = vmatpush1.bf16.msra.mxu0 %v364
  %490 = vmatprep.subr.bf16.mxu0 0
  %491 = vmatpush1.bf16.msra.mxu0 %v365
  %492 = vmatprep.subr.bf16.mxu0 0
  %493 = vmatpush1.bf16.msra.mxu0 %v366
  %494 = vmatprep.subr.bf16.mxu0 0
  %495 = vmatpush1.bf16.msra.mxu0 %v367
  %496 = vmatprep.subr.bf16.mxu0 0
  %497 = vmatpush1.bf16.msra.mxu0 %v368
  %498 = vmatprep.mubr.bf16.mxu0 %v160
  %499 = vmatmul.mubr.bf16.gmra.mrb[0].mxu0 %v159
  %v500 = vpop.f32.mrb[0].mxu0
  %v501 = vadd.f32 %v452, %v500
  %v502 = vpop.f32.mrb[0].mxu0
  %v503 = vpop.f32.mrb[0].mxu0
  %v504 = vadd.f32 %v455, %v503
  %v505 = vpop.f32.mrb[0].mxu0
  %506 = vmatprep.mubr.bf16.mxu0 %v165
  %507 = vmatmul.mubr.bf16.gmra.mrb[0].mxu0 %v164
  %v508 = vpop.f32.mrb[0].mxu0
  %v509 = vadd.f32 %v460, %v508
  %v510 = vpop.f32.mrb[0].mxu0
  %v511 = vpop.f32.mrb[0].mxu0
  %v512 = vadd.f32 %v463, %v511
  %v513 = vpop.f32.mrb[0].mxu0
  %514 = vdwg.mxu0
  %515 = vmatprep.subr.bf16.mxu0 0
  %516 = vmatpush1.bf16.msra.mxu0 %v369
  %517 = vmatprep.subr.bf16.mxu0 0
  %518 = vmatpush1.bf16.msra.mxu0 %v370
  %519 = vmatprep.subr.bf16.mxu0 0
  %520 = vmatpush1.bf16.msra.mxu0 %v371
  %521 = vmatprep.subr.bf16.mxu0 0
  %522 = vmatpush1.bf16.msra.mxu0 %v372
  %523 = vmatprep.subr.bf16.mxu0 0
  %524 = vmatpush1.bf16.msra.mxu0 %v373
  %525 = vmatprep.subr.bf16.mxu0 0
  %526 = vmatpush1.bf16.msra.mxu0 %v374
  %527 = vmatprep.subr.bf16.mxu0 0
  %528 = vmatpush1.bf16.msra.mxu0 %v375
  %529 = vmatprep.subr.bf16.mxu0 0
  %530 = vmatpush1.bf16.msra.mxu0 %v376
  %531 = vmatprep.subr.bf16.mxu0 0
  %532 = vmatpush1.bf16.msra.mxu0 0
  %533 = vmatprep.subr.bf16.mxu0 0
  %534 = vmatpush1.bf16.msra.mxu0 0
  %535 = vmatprep.subr.bf16.mxu0 0
  %536 = vmatpush1.bf16.msra.mxu0 0
  %537 = vmatprep.subr.bf16.mxu0 0
  %538 = vmatpush1.bf16.msra.mxu0 0
  %539 = vmatprep.subr.bf16.mxu0 0
  %540 = vmatpush1.bf16.msra.mxu0 0
  %541 = vmatprep.subr.bf16.mxu0 0
  %542 = vmatpush1.bf16.msra.mxu0 0
  %543 = vmatprep.subr.bf16.mxu0 0
  %544 = vmatpush1.bf16.msra.mxu0 0
  %545 = vmatprep.subr.bf16.mxu0 0
  %546 = vmatpush1.bf16.msra.mxu0 0
  %547 = vmatprep.mubr.bf16.mxu0 0
  %548 = vmatmul.mubr.bf16.gmra.mrb[0].mxu0 %v161
  %v549 = vpop.f32.mrb[0].mxu0
  %v550 = vadd.f32 %v501, %v549
  %v551 = vpop.f32.mrb[0].mxu0
  %v552 = vpop.f32.mrb[0].mxu0
  %v553 = vadd.f32 %v504, %v552
  %v554 = vpop.f32.mrb[0].mxu0
  %555 = vmatprep.mubr.bf16.mxu0 0
  %556 = vmatmul.mubr.bf16.gmra.mrb[0].mxu0 %v166
  %v557 = vpop.f32.mrb[0].mxu0
  %v558 = vadd.f32 %v509, %v557
  %v559 = vpop.f32.mrb[0].mxu0
  %v560 = vpop.f32.mrb[0].mxu0
  %v561 = vadd.f32 %v512, %v560
  %v562 = vpop.f32.mrb[0].mxu0
  %563 = vdwg.mxu0
  %vm564 = vcmask 523264
  %v565 = vsel %vm564, %v550, 0.0
  %v566 = vsel %vm564, %v553, 0.0
  %v567 = vadd.f32 %v565, %v566
  %v568 = vsel %vm564, %v558, 0.0
  %v569 = vadd.f32 %v567, %v568
  %v570 = vsel %vm564, %v561, 0.0
  %v571 = vadd.f32 %v569, %v570
  %v572 = vrot.slane %v571, 4
  %v573 = vadd.f32 %v571, %v572
  %v574 = vrot.slane %v573, 2
  %v575 = vadd.f32 %v573, %v574
  %v576 = vrot.slane %v575, 1
  %v577 = vadd.f32 %v575, %v576
  %v578 = vmul.f32 %v577, 0.03125
  %v579 = vsub.f32 %v550, %v578
  %v580 = vsub.f32 %v553, %v578
  %v581 = vsub.f32 %v558, %v578
  %v582 = vsub.f32 %v561, %v578
  %v583 = vmul.f32 %v579, %v579
  %v584 = vmul.f32 %v580, %v580
  %v585 = vmul.f32 %v581, %v581
  %v586 = vmul.f32 %v582, %v582
  %v587 = vsel %vm564, %v583, 0.0
  %v588 = vsel %vm564, %v584, 0.0
  %v589 = vadd.f32 %v587, %v588
  %v590 = vsel %vm564, %v585, 0.0
  %v591 = vadd.f32 %v589, %v590
  %v592 = vsel %vm564, %v586, 0.0
  %v593 = vadd.f32 %v591, %v592
  %v594 = vrot.slane %v593, 4
  %v595 = vadd.f32 %v593, %v594
  %v596 = vrot.slane %v595, 2
  %v597 = vadd.f32 %v595, %v596
  %v598 = vrot.slane %v597, 1
  %v599 = vadd.f32 %v597, %v598
  %v600 = vmul.f32 %v599, 0.03125
  %v601 = vld [vmem:[%s5] sm:$0x1]
  %v602 = vadd.f32 %v600, 1e-05
  %v603 = vrsqrt.pop %v602
  %v604 = vmul.f32 %v601, %v603
  %v606 = vlaneseq
  %v607 = vshrl.u32 %v606, 7
  %v608 = vsub.s32 0, %v607
  %v609 = vrot.slane %v604, %v608
  %v611 = vmul.f32 %v579, %v609
  %v612 = vmul.f32 %v580, %v609
  %v613 = vmul.f32 %v581, %v609
  %v614 = vmul.f32 %v582, %v609
  %v615 = vld [vmem:[%s6] sm:$0x1]
  %v617 = vlaneseq
  %v618 = vshrl.u32 %v617, 7
  %v619 = vsub.s32 0, %v618
  %v620 = vrot.slane %v615, %v619
  %v622 = vadd.f32 %v611, %v620
  %v623 = vadd.f32 %v612, %v620
  %v624 = vadd.f32 %v613, %v620
  %v625 = vadd.f32 %v614, %v620
  %v626 = vmax.f32 %v622, 0.0
  %v627 = vmax.f32 %v623, 0.0
  %v628 = vmax.f32 %v624, 0.0
  %v629 = vmax.f32 %v625, 0.0
  %v634 = vcombine.high %v626, %v626
  %v635 = vcombine.high %v627, %v627
  %v636 = vcombine.high %v628, %v628
  %v637 = vcombine.high %v629, %v629
  %vm642 = vcmask 519168
  %v643 = vsel %vm642, %v626, -inf
  %v644 = vsel %vm642, %v634, -inf
  %v645 = vmax.f32 %v643, %v644
  %v646 = vsel %vm642, %v627, -inf
  %v647 = vsel %vm642, %v635, -inf
  %v648 = vmax.f32 %v646, %v647
  %v649 = vsel %vm642, %v628, -inf
  %v650 = vsel %vm642, %v636, -inf
  %v651 = vmax.f32 %v649, %v650
  %v652 = vsel %vm642, %v629, -inf
  %v653 = vsel %vm642, %v637, -inf
  %v654 = vmax.f32 %v652, %v653
  %v660 = vunpack.c.l.s4 1983009808
  %v661 = vunpack.c.0.s8 %v660
  %v662 = vlaneseq
  %v663 = vshrl.u32 %v662, 7
  %v664 = vsub.s32 %v661, %v663
  %v665 = vrot.slane %v645, %v664
  %v666 = vcombine.high %v665, %v665
  %v668 = vunpack.c.l.s4 1983009808
  %v669 = vunpack.c.0.s8 %v668
  %v670 = vlaneseq
  %v671 = vshrl.u32 %v670, 7
  %v672 = vsub.s32 %v669, %v671
  %v673 = vrot.slane %v648, %v672
  %v674 = vcombine.high %v673, %v673
  %v676 = vunpack.c.l.s4 1983009808
  %v677 = vunpack.c.0.s8 %v676
  %v678 = vlaneseq
  %v679 = vshrl.u32 %v678, 7
  %v680 = vsub.s32 %v677, %v679
  %v681 = vrot.slane %v651, %v680
  %v682 = vcombine.high %v681, %v681
  %v684 = vunpack.c.l.s4 1983009808
  %v685 = vunpack.c.0.s8 %v684
  %v686 = vlaneseq
  %v687 = vshrl.u32 %v686, 7
  %v688 = vsub.s32 %v685, %v687
  %v689 = vrot.slane %v654, %v688
  %v690 = vcombine.high %v689, %v689
  %vm699 = vcmask 517120
  %v700 = vsel %vm699, %v665, -inf
  %v701 = vrot.slane %v700, 4
  %v702 = vmax.f32 %v700, %v701
  %v703 = vrot.slane %v702, 2
  %v704 = vmax.f32 %v702, %v703
  %v705 = vrot.slane %v704, 1
  %v706 = vmax.f32 %v704, %v705
  %v707 = vsel %vm699, %v666, -inf
  %v708 = vrot.slane %v707, 4
  %v709 = vmax.f32 %v707, %v708
  %v710 = vrot.slane %v709, 2
  %v711 = vmax.f32 %v709, %v710
  %v712 = vrot.slane %v711, 1
  %v713 = vmax.f32 %v711, %v712
  %v714 = vsel %vm699, %v673, -inf
  %v715 = vrot.slane %v714, 4
  %v716 = vmax.f32 %v714, %v715
  %v717 = vrot.slane %v716, 2
  %v718 = vmax.f32 %v716, %v717
  %v719 = vrot.slane %v718, 1
  %v720 = vmax.f32 %v718, %v719
  %v721 = vsel %vm699, %v674, -inf
  %v722 = vrot.slane %v721, 4
  %v723 = vmax.f32 %v721, %v722
  %v724 = vrot.slane %v723, 2
  %v725 = vmax.f32 %v723, %v724
  %v726 = vrot.slane %v725, 1
  %v727 = vmax.f32 %v725, %v726
  %v728 = vsel %vm699, %v681, -inf
  %v729 = vrot.slane %v728, 4
  %v730 = vmax.f32 %v728, %v729
  %v731 = vrot.slane %v730, 2
  %v732 = vmax.f32 %v730, %v731
  %v733 = vrot.slane %v732, 1
  %v734 = vmax.f32 %v732, %v733
  %v735 = vsel %vm699, %v682, -inf
  %v736 = vrot.slane %v735, 4
  %v737 = vmax.f32 %v735, %v736
  %v738 = vrot.slane %v737, 2
  %v739 = vmax.f32 %v737, %v738
  %v740 = vrot.slane %v739, 1
  %v741 = vmax.f32 %v739, %v740
  %v742 = vsel %vm699, %v689, -inf
  %v743 = vrot.slane %v742, 4
  %v744 = vmax.f32 %v742, %v743
  %v745 = vrot.slane %v744, 2
  %v746 = vmax.f32 %v744, %v745
  %v747 = vrot.slane %v746, 1
  %v748 = vmax.f32 %v746, %v747
  %v749 = vsel %vm699, %v690, -inf
  %v750 = vrot.slane %v749, 4
  %v751 = vmax.f32 %v749, %v750
  %v752 = vrot.slane %v751, 2
  %v753 = vmax.f32 %v751, %v752
  %v754 = vrot.slane %v753, 1
  %v755 = vmax.f32 %v753, %v754
  %vm758 = vcmask 1041409
  %v759 = vsel %vm758, %v734, %v706
  %v763 = vsel %vm758, %v741, %v713
  %764 = vrot.lane.b32.xlu0 %v763, 64
  %v765 = vpop.permute.xlu0 %764
  %v769 = vsel %vm758, %v748, %v720
  %v773 = vsel %vm758, %v755, %v727
  %774 = vrot.lane.b32.xlu0 %v773, 64
  %v775 = vpop.permute.xlu0 %774
  %v777 = vsel %vm564, %v759, %v765
  %v778 = vsel %vm564, %v769, %v775
  %v779 = vpack.c.bf16 %v777, %v777
  %v780 = vpack.c.bf16 %v778, %v778
  %v781 = vld [vmem:[%s3] sm:$0xff]
  %v782 = vld [vmem:[%s3 + $0x8] sm:$0xff]
  %v783 = vld [vmem:[%s3 + $0x10] sm:$0xff]
  %v784 = vld [vmem:[%s3 + $0x18] sm:$0xff]
  %v785 = vld [vmem:[%s3 + $0x20] sm:$0xff]
  %v786 = vld [vmem:[%s3 + $0x28] sm:$0xff]
  %v787 = vld [vmem:[%s3 + $0x30] sm:$0xff]
  %v788 = vld [vmem:[%s3 + $0x38] sm:$0xff]
  %v789 = vld [vmem:[%s3 + $0x40] sm:$0xff]
  %v790 = vld [vmem:[%s3 + $0x48] sm:$0xff]
  %v791 = vld [vmem:[%s3 + $0x50] sm:$0xff]
  %v792 = vld [vmem:[%s3 + $0x58] sm:$0xff]
  %v793 = vld [vmem:[%s3 + $0x60] sm:$0xff]
  %v794 = vld [vmem:[%s3 + $0x68] sm:$0xff]
  %v795 = vld [vmem:[%s3 + $0x70] sm:$0xff]
  %v796 = vld [vmem:[%s3 + $0x78] sm:$0xff]
  %v797 = vld [vmem:[%s3 + $0x80] sm:$0xff]
  %v798 = vld [vmem:[%s3 + $0x88] sm:$0xff]
  %v799 = vld [vmem:[%s3 + $0x90] sm:$0xff]
  %v800 = vld [vmem:[%s3 + $0x98] sm:$0xff]
  %v801 = vld [vmem:[%s3 + $0xa0] sm:$0xff]
  %v802 = vld [vmem:[%s3 + $0xa8] sm:$0xff]
  %v803 = vld [vmem:[%s3 + $0xb0] sm:$0xff]
  %v804 = vld [vmem:[%s3 + $0xb8] sm:$0xff]
  %v805 = vld [vmem:[%s3 + $0xc0] sm:$0xff]
  %v806 = vld [vmem:[%s3 + $0xc8] sm:$0xff]
  %v807 = vld [vmem:[%s3 + $0xd0] sm:$0xff]
  %v808 = vld [vmem:[%s3 + $0xd8] sm:$0xff]
  %v809 = vld [vmem:[%s3 + $0xe0] sm:$0xff]
  %v810 = vld [vmem:[%s3 + $0xe8] sm:$0xff]
  %v811 = vld [vmem:[%s3 + $0xf0] sm:$0xff]
  %v812 = vld [vmem:[%s3 + $0xf8] sm:$0xff]
  %v845 = vunpack.c.l.b16 %v781
  %v846 = vunpack.c.h.b16 %v781
  %v847 = vunpack.c.l.b16 %v782
  %v848 = vunpack.c.h.b16 %v782
  %v849 = vunpack.c.l.b16 %v783
  %v850 = vunpack.c.h.b16 %v783
  %v851 = vunpack.c.l.b16 %v784
  %v852 = vunpack.c.h.b16 %v784
  %v853 = vunpack.c.l.b16 %v785
  %v854 = vunpack.c.h.b16 %v785
  %v855 = vunpack.c.l.b16 %v786
  %v856 = vunpack.c.h.b16 %v786
  %v857 = vunpack.c.l.b16 %v787
  %v858 = vunpack.c.h.b16 %v787
  %v859 = vunpack.c.l.b16 %v788
  %v860 = vunpack.c.h.b16 %v788
  %v861 = vunpack.c.l.b16 %v789
  %v862 = vunpack.c.h.b16 %v789
  %v863 = vunpack.c.l.b16 %v790
  %v864 = vunpack.c.h.b16 %v790
  %v865 = vunpack.c.l.b16 %v791
  %v866 = vunpack.c.h.b16 %v791
  %v867 = vunpack.c.l.b16 %v792
  %v868 = vunpack.c.h.b16 %v792
  %v869 = vunpack.c.l.b16 %v793
  %v870 = vunpack.c.h.b16 %v793
  %v871 = vunpack.c.l.b16 %v794
  %v872 = vunpack.c.h.b16 %v794
  %v873 = vunpack.c.l.b16 %v795
  %v874 = vunpack.c.h.b16 %v795
  %v875 = vunpack.c.l.b16 %v796
  %v876 = vunpack.c.h.b16 %v796
  %v877 = vunpack.c.l.b16 %v797
  %v878 = vunpack.c.h.b16 %v797
  %v879 = vunpack.c.l.b16 %v798
  %v880 = vunpack.c.h.b16 %v798
  %v881 = vunpack.c.l.b16 %v799
  %v882 = vunpack.c.h.b16 %v799
  %v883 = vunpack.c.l.b16 %v800
  %v884 = vunpack.c.h.b16 %v800
  %v885 = vunpack.c.l.b16 %v801
  %v886 = vunpack.c.h.b16 %v801
  %v887 = vunpack.c.l.b16 %v802
  %v888 = vunpack.c.h.b16 %v802
  %v889 = vunpack.c.l.b16 %v803
  %v890 = vunpack.c.h.b16 %v803
  %v891 = vunpack.c.l.b16 %v804
  %v892 = vunpack.c.h.b16 %v804
  %v893 = vunpack.c.l.b16 %v805
  %v894 = vunpack.c.h.b16 %v805
  %v895 = vunpack.c.l.b16 %v806
  %v896 = vunpack.c.h.b16 %v806
  %v897 = vunpack.c.l.b16 %v807
  %v898 = vunpack.c.h.b16 %v807
  %v899 = vunpack.c.l.b16 %v808
  %v900 = vunpack.c.h.b16 %v808
  %v901 = vunpack.c.l.b16 %v809
  %v902 = vunpack.c.h.b16 %v809
  %v903 = vunpack.c.l.b16 %v810
  %v904 = vunpack.c.h.b16 %v810
  %v905 = vunpack.c.l.b16 %v811
  %v906 = vunpack.c.h.b16 %v811
  %v907 = vunpack.c.l.b16 %v812
  %v908 = vunpack.c.h.b16 %v812
  %v909 = vpack.c.b16 %v847, %v845
  %v910 = vpack.c.b16 %v848, %v846
  %v911 = vpack.c.b16 %v851, %v849
  %v912 = vpack.c.b16 %v852, %v850
  %v913 = vpack.c.b16 %v855, %v853
  %v914 = vpack.c.b16 %v856, %v854
  %v915 = vpack.c.b16 %v859, %v857
  %v916 = vpack.c.b16 %v860, %v858
  %v917 = vpack.c.b16 %v863, %v861
  %v918 = vpack.c.b16 %v864, %v862
  %v919 = vpack.c.b16 %v867, %v865
  %v920 = vpack.c.b16 %v868, %v866
  %v921 = vpack.c.b16 %v871, %v869
  %v922 = vpack.c.b16 %v872, %v870
  %v923 = vpack.c.b16 %v875, %v873
  %v924 = vpack.c.b16 %v876, %v874
  %v925 = vpack.c.b16 %v879, %v877
  %v926 = vpack.c.b16 %v880, %v878
  %v927 = vpack.c.b16 %v883, %v881
  %v928 = vpack.c.b16 %v884, %v882
  %v929 = vpack.c.b16 %v887, %v885
  %v930 = vpack.c.b16 %v888, %v886
  %v931 = vpack.c.b16 %v891, %v889
  %v932 = vpack.c.b16 %v892, %v890
  %v933 = vpack.c.b16 %v895, %v893
  %v934 = vpack.c.b16 %v896, %v894
  %v935 = vpack.c.b16 %v899, %v897
  %v936 = vpack.c.b16 %v900, %v898
  %v937 = vpack.c.b16 %v903, %v901
  %v938 = vpack.c.b16 %v904, %v902
  %v939 = vpack.c.b16 %v907, %v905
  %v940 = vpack.c.b16 %v908, %v906
  %973 = vmatprep.subr.bf16.mxu0 %v910
  %974 = vmatpush1.bf16.msra.mxu0 %v909
  %975 = vmatprep.subr.bf16.mxu0 %v912
  %976 = vmatpush1.bf16.msra.mxu0 %v911
  %977 = vmatprep.subr.bf16.mxu0 %v914
  %978 = vmatpush1.bf16.msra.mxu0 %v913
  %979 = vmatprep.subr.bf16.mxu0 %v916
  %980 = vmatpush1.bf16.msra.mxu0 %v915
  %981 = vmatprep.subr.bf16.mxu0 %v918
  %982 = vmatpush1.bf16.msra.mxu0 %v917
  %983 = vmatprep.subr.bf16.mxu0 %v920
  %984 = vmatpush1.bf16.msra.mxu0 %v919
  %985 = vmatprep.subr.bf16.mxu0 %v922
  %986 = vmatpush1.bf16.msra.mxu0 %v921
  %987 = vmatprep.subr.bf16.mxu0 %v924
  %988 = vmatpush1.bf16.msra.mxu0 %v923
  %989 = vmatprep.subr.bf16.mxu0 %v926
  %990 = vmatpush1.bf16.msra.mxu0 %v925
  %991 = vmatprep.subr.bf16.mxu0 %v928
  %992 = vmatpush1.bf16.msra.mxu0 %v927
  %993 = vmatprep.subr.bf16.mxu0 %v930
  %994 = vmatpush1.bf16.msra.mxu0 %v929
  %995 = vmatprep.subr.bf16.mxu0 %v932
  %996 = vmatpush1.bf16.msra.mxu0 %v931
  %997 = vmatprep.subr.bf16.mxu0 %v934
  %998 = vmatpush1.bf16.msra.mxu0 %v933
  %999 = vmatprep.subr.bf16.mxu0 %v936
  %1000 = vmatpush1.bf16.msra.mxu0 %v935
  %1001 = vmatprep.subr.bf16.mxu0 %v938
  %1002 = vmatpush1.bf16.msra.mxu0 %v937
  %1003 = vmatprep.subr.bf16.mxu0 %v940
  %1004 = vmatpush1.bf16.msra.mxu0 %v939
  %1005 = vmatprep.mubr.bf16.mxu0 %v780
  %1006 = vmatmul.mubr.bf16.gmra.mrb[0].mxu0 %v779
  %v1007 = vpop.f32.mrb[0].mxu0
  %v1008 = vadd.f32 0.0, %v1007
  %v1009 = vpop.f32.mrb[0].mxu0
  %v1010 = vadd.f32 0.0, %v1009
  %v1011 = vpop.f32.mrb[0].mxu0
  %v1012 = vpop.f32.mrb[0].mxu0
  %1013 = vdwg.mxu0
  %v1014 = vlaneseq
  %v1015 = vshrl.u32 %v1014, 7
  %v1016 = vadd.s32 %v1015, 8
  %v1017 = vadd.s32 %v1015, 16
  %v1018 = vadd.s32 %v1015, 24
  %v1019 = vadd.s32 %v1015, 32
  %v1020 = vadd.s32 %v1015, 40
  %v1021 = vadd.s32 %v1015, 48
  %v1022 = vadd.s32 %v1015, 56
  %v1023 = vadd.s32 %v1015, 64
  %v1024 = vadd.s32 %v1015, 72
  %v1025 = vadd.s32 %v1015, 80
  %v1026 = vadd.s32 %v1015, 88
  %v1027 = vadd.s32 %v1015, 96
  %v1028 = vadd.s32 %v1015, 104
  %v1029 = vadd.s32 %v1015, 112
  %v1030 = vadd.s32 %v1015, 120
  %v1031 = vadd.s32 %v1015, 128
  %v1032 = vadd.s32 %v1015, 136
  %v1033 = vadd.s32 %v1015, 144
  %v1034 = vadd.s32 %v1015, 152
  %v1035 = vadd.s32 %v1015, 160
  %v1036 = vadd.s32 %v1015, 168
  %v1037 = vadd.s32 %v1015, 176
  %v1038 = vadd.s32 %v1015, 184
  %v1039 = vadd.s32 %v1015, 192
  %v1040 = vadd.s32 %v1015, 200
  %v1041 = vadd.s32 %v1015, 208
  %v1042 = vadd.s32 %v1015, 216
  %v1043 = vadd.s32 %v1015, 224
  %v1044 = vadd.s32 %v1015, 232
  %v1045 = vadd.s32 %v1015, 240
  %v1046 = vadd.s32 %v1015, 248
  %v1047 = vlaneseq
  %v1048 = vand.u32 %v1047, 127
  %v1049 = vadd.s32 %v1048, 128
  %vm1050 = vcmp.eq.s32.totalorder %v1015, %v1048
  %vm1051 = vcmp.eq.s32.totalorder %v1016, %v1048
  %vm1052 = vcmp.eq.s32.totalorder %v1017, %v1048
  %vm1053 = vcmp.eq.s32.totalorder %v1018, %v1048
  %vm1054 = vcmp.eq.s32.totalorder %v1019, %v1048
  %vm1055 = vcmp.eq.s32.totalorder %v1020, %v1048
  %vm1056 = vcmp.eq.s32.totalorder %v1021, %v1048
  %vm1057 = vcmp.eq.s32.totalorder %v1022, %v1048
  %vm1058 = vcmp.eq.s32.totalorder %v1023, %v1048
  %vm1059 = vcmp.eq.s32.totalorder %v1024, %v1048
  %vm1060 = vcmp.eq.s32.totalorder %v1025, %v1048
  %vm1061 = vcmp.eq.s32.totalorder %v1026, %v1048
  %vm1062 = vcmp.eq.s32.totalorder %v1027, %v1048
  %vm1063 = vcmp.eq.s32.totalorder %v1028, %v1048
  %vm1064 = vcmp.eq.s32.totalorder %v1029, %v1048
  %vm1065 = vcmp.eq.s32.totalorder %v1030, %v1048
  %vm1066 = vcmp.eq.s32.totalorder %v1031, %v1048
  %vm1067 = vcmp.eq.s32.totalorder %v1032, %v1048
  %vm1068 = vcmp.eq.s32.totalorder %v1033, %v1048
  %vm1069 = vcmp.eq.s32.totalorder %v1034, %v1048
  %vm1070 = vcmp.eq.s32.totalorder %v1035, %v1048
  %vm1071 = vcmp.eq.s32.totalorder %v1036, %v1048
  %vm1072 = vcmp.eq.s32.totalorder %v1037, %v1048
  %vm1073 = vcmp.eq.s32.totalorder %v1038, %v1048
  %vm1074 = vcmp.eq.s32.totalorder %v1039, %v1048
  %vm1075 = vcmp.eq.s32.totalorder %v1040, %v1048
  %vm1076 = vcmp.eq.s32.totalorder %v1041, %v1048
  %vm1077 = vcmp.eq.s32.totalorder %v1042, %v1048
  %vm1078 = vcmp.eq.s32.totalorder %v1043, %v1048
  %vm1079 = vcmp.eq.s32.totalorder %v1044, %v1048
  %vm1080 = vcmp.eq.s32.totalorder %v1045, %v1048
  %vm1081 = vcmp.eq.s32.totalorder %v1046, %v1048
  %v1082 = vsel %vm1050, 1.0, 0.0
  %v1083 = vsel %vm1051, 1.0, 0.0
  %v1084 = vsel %vm1052, 1.0, 0.0
  %v1085 = vsel %vm1053, 1.0, 0.0
  %v1086 = vsel %vm1054, 1.0, 0.0
  %v1087 = vsel %vm1055, 1.0, 0.0
  %v1088 = vsel %vm1056, 1.0, 0.0
  %v1089 = vsel %vm1057, 1.0, 0.0
  %v1090 = vsel %vm1058, 1.0, 0.0
  %v1091 = vsel %vm1059, 1.0, 0.0
  %v1092 = vsel %vm1060, 1.0, 0.0
  %v1093 = vsel %vm1061, 1.0, 0.0
  %v1094 = vsel %vm1062, 1.0, 0.0
  %v1095 = vsel %vm1063, 1.0, 0.0
  %v1096 = vsel %vm1064, 1.0, 0.0
  %v1097 = vsel %vm1065, 1.0, 0.0
  %v1098 = vsel %vm1066, 1.0, 0.0
  %v1099 = vsel %vm1067, 1.0, 0.0
  %v1100 = vsel %vm1068, 1.0, 0.0
  %v1101 = vsel %vm1069, 1.0, 0.0
  %v1102 = vsel %vm1070, 1.0, 0.0
  %v1103 = vsel %vm1071, 1.0, 0.0
  %v1104 = vsel %vm1072, 1.0, 0.0
  %v1105 = vsel %vm1073, 1.0, 0.0
  %v1106 = vsel %vm1074, 1.0, 0.0
  %v1107 = vsel %vm1075, 1.0, 0.0
  %v1108 = vsel %vm1076, 1.0, 0.0
  %v1109 = vsel %vm1077, 1.0, 0.0
  %v1110 = vsel %vm1078, 1.0, 0.0
  %v1111 = vsel %vm1079, 1.0, 0.0
  %v1112 = vsel %vm1080, 1.0, 0.0
  %v1113 = vsel %vm1081, 1.0, 0.0
  %v1114 = vadd.f32 %v1082, 0.0
  %v1115 = vadd.f32 %v1083, 0.0
  %v1116 = vadd.f32 %v1084, 0.0
  %v1117 = vadd.f32 %v1085, 0.0
  %v1118 = vadd.f32 %v1086, 0.0
  %v1119 = vadd.f32 %v1087, 0.0
  %v1120 = vadd.f32 %v1088, 0.0
  %v1121 = vadd.f32 %v1089, 0.0
  %v1122 = vadd.f32 %v1090, 0.0
  %v1123 = vadd.f32 %v1091, 0.0
  %v1124 = vadd.f32 %v1092, 0.0
  %v1125 = vadd.f32 %v1093, 0.0
  %v1126 = vadd.f32 %v1094, 0.0
  %v1127 = vadd.f32 %v1095, 0.0
  %v1128 = vadd.f32 %v1096, 0.0
  %v1129 = vadd.f32 %v1097, 0.0
  %v1130 = vadd.f32 %v1098, 0.0
  %v1131 = vadd.f32 %v1099, 0.0
  %v1132 = vadd.f32 %v1100, 0.0
  %v1133 = vadd.f32 %v1101, 0.0
  %v1134 = vadd.f32 %v1102, 0.0
  %v1135 = vadd.f32 %v1103, 0.0
  %v1136 = vadd.f32 %v1104, 0.0
  %v1137 = vadd.f32 %v1105, 0.0
  %v1138 = vadd.f32 %v1106, 0.0
  %v1139 = vadd.f32 %v1107, 0.0
  %v1140 = vadd.f32 %v1108, 0.0
  %v1141 = vadd.f32 %v1109, 0.0
  %v1142 = vadd.f32 %v1110, 0.0
  %v1143 = vadd.f32 %v1111, 0.0
  %v1144 = vadd.f32 %v1112, 0.0
  %v1145 = vadd.f32 %v1113, 0.0
  %vm1146 = vcmp.eq.s32.totalorder %v1048, %v1015
  %vm1147 = vcmp.eq.s32.totalorder %v1049, %v1015
  %vm1148 = vcmp.eq.s32.totalorder %v1048, %v1016
  %vm1149 = vcmp.eq.s32.totalorder %v1049, %v1016
  %vm1150 = vcmp.eq.s32.totalorder %v1048, %v1017
  %vm1151 = vcmp.eq.s32.totalorder %v1049, %v1017
  %vm1152 = vcmp.eq.s32.totalorder %v1048, %v1018
  %vm1153 = vcmp.eq.s32.totalorder %v1049, %v1018
  %vm1154 = vcmp.eq.s32.totalorder %v1048, %v1019
  %vm1155 = vcmp.eq.s32.totalorder %v1049, %v1019
  %vm1156 = vcmp.eq.s32.totalorder %v1048, %v1020
  %vm1157 = vcmp.eq.s32.totalorder %v1049, %v1020
  %vm1158 = vcmp.eq.s32.totalorder %v1048, %v1021
  %vm1159 = vcmp.eq.s32.totalorder %v1049, %v1021
  %vm1160 = vcmp.eq.s32.totalorder %v1048, %v1022
  %vm1161 = vcmp.eq.s32.totalorder %v1049, %v1022
  %v1162 = vsel %vm1146, 1.0, 0.0
  %v1163 = vsel %vm1147, 1.0, 0.0
  %v1164 = vsel %vm1148, 1.0, 0.0
  %v1165 = vsel %vm1149, 1.0, 0.0
  %v1166 = vsel %vm1150, 1.0, 0.0
  %v1167 = vsel %vm1151, 1.0, 0.0
  %v1168 = vsel %vm1152, 1.0, 0.0
  %v1169 = vsel %vm1153, 1.0, 0.0
  %v1170 = vsel %vm1154, 1.0, 0.0
  %v1171 = vsel %vm1155, 1.0, 0.0
  %v1172 = vsel %vm1156, 1.0, 0.0
  %v1173 = vsel %vm1157, 1.0, 0.0
  %v1174 = vsel %vm1158, 1.0, 0.0
  %v1175 = vsel %vm1159, 1.0, 0.0
  %v1176 = vsel %vm1160, 1.0, 0.0
  %v1177 = vsel %vm1161, 1.0, 0.0
  %v1178 = vadd.f32 %v1162, 0.0
  %v1179 = vadd.f32 %v1163, 0.0
  %v1180 = vadd.f32 %v1164, 0.0
  %v1181 = vadd.f32 %v1165, 0.0
  %v1182 = vadd.f32 %v1166, 0.0
  %v1183 = vadd.f32 %v1167, 0.0
  %v1184 = vadd.f32 %v1168, 0.0
  %v1185 = vadd.f32 %v1169, 0.0
  %v1186 = vadd.f32 %v1170, 0.0
  %v1187 = vadd.f32 %v1171, 0.0
  %v1188 = vadd.f32 %v1172, 0.0
  %v1189 = vadd.f32 %v1173, 0.0
  %v1190 = vadd.f32 %v1174, 0.0
  %v1191 = vadd.f32 %v1175, 0.0
  %v1192 = vadd.f32 %v1176, 0.0
  %v1193 = vadd.f32 %v1177, 0.0
  %v1194 = vadd.s32 %v1048, 64
  %vm1195 = vcmp.eq.s32.totalorder %v1015, %v1194
  %vm1196 = vcmp.eq.s32.totalorder %v1016, %v1194
  %vm1197 = vcmp.eq.s32.totalorder %v1017, %v1194
  %vm1198 = vcmp.eq.s32.totalorder %v1018, %v1194
  %vm1199 = vcmp.eq.s32.totalorder %v1019, %v1194
  %vm1200 = vcmp.eq.s32.totalorder %v1020, %v1194
  %vm1201 = vcmp.eq.s32.totalorder %v1021, %v1194
  %vm1202 = vcmp.eq.s32.totalorder %v1022, %v1194
  %vm1203 = vcmp.eq.s32.totalorder %v1023, %v1194
  %vm1204 = vcmp.eq.s32.totalorder %v1024, %v1194
  %vm1205 = vcmp.eq.s32.totalorder %v1025, %v1194
  %vm1206 = vcmp.eq.s32.totalorder %v1026, %v1194
  %vm1207 = vcmp.eq.s32.totalorder %v1027, %v1194
  %vm1208 = vcmp.eq.s32.totalorder %v1028, %v1194
  %vm1209 = vcmp.eq.s32.totalorder %v1029, %v1194
  %vm1210 = vcmp.eq.s32.totalorder %v1030, %v1194
  %vm1211 = vcmp.eq.s32.totalorder %v1031, %v1194
  %vm1212 = vcmp.eq.s32.totalorder %v1032, %v1194
  %vm1213 = vcmp.eq.s32.totalorder %v1033, %v1194
  %vm1214 = vcmp.eq.s32.totalorder %v1034, %v1194
  %vm1215 = vcmp.eq.s32.totalorder %v1035, %v1194
  %vm1216 = vcmp.eq.s32.totalorder %v1036, %v1194
  %vm1217 = vcmp.eq.s32.totalorder %v1037, %v1194
  %vm1218 = vcmp.eq.s32.totalorder %v1038, %v1194
  %vm1219 = vcmp.eq.s32.totalorder %v1039, %v1194
  %vm1220 = vcmp.eq.s32.totalorder %v1040, %v1194
  %vm1221 = vcmp.eq.s32.totalorder %v1041, %v1194
  %vm1222 = vcmp.eq.s32.totalorder %v1042, %v1194
  %vm1223 = vcmp.eq.s32.totalorder %v1043, %v1194
  %vm1224 = vcmp.eq.s32.totalorder %v1044, %v1194
  %vm1225 = vcmp.eq.s32.totalorder %v1045, %v1194
  %vm1226 = vcmp.eq.s32.totalorder %v1046, %v1194
  %v1227 = vsel %vm1195, 1.0, 0.0
  %v1228 = vsel %vm1196, 1.0, 0.0
  %v1229 = vsel %vm1197, 1.0, 0.0
  %v1230 = vsel %vm1198, 1.0, 0.0
  %v1231 = vsel %vm1199, 1.0, 0.0
  %v1232 = vsel %vm1200, 1.0, 0.0
  %v1233 = vsel %vm1201, 1.0, 0.0
  %v1234 = vsel %vm1202, 1.0, 0.0
  %v1235 = vsel %vm1203, 1.0, 0.0
  %v1236 = vsel %vm1204, 1.0, 0.0
  %v1237 = vsel %vm1205, 1.0, 0.0
  %v1238 = vsel %vm1206, 1.0, 0.0
  %v1239 = vsel %vm1207, 1.0, 0.0
  %v1240 = vsel %vm1208, 1.0, 0.0
  %v1241 = vsel %vm1209, 1.0, 0.0
  %v1242 = vsel %vm1210, 1.0, 0.0
  %v1243 = vsel %vm1211, 1.0, 0.0
  %v1244 = vsel %vm1212, 1.0, 0.0
  %v1245 = vsel %vm1213, 1.0, 0.0
  %v1246 = vsel %vm1214, 1.0, 0.0
  %v1247 = vsel %vm1215, 1.0, 0.0
  %v1248 = vsel %vm1216, 1.0, 0.0
  %v1249 = vsel %vm1217, 1.0, 0.0
  %v1250 = vsel %vm1218, 1.0, 0.0
  %v1251 = vsel %vm1219, 1.0, 0.0
  %v1252 = vsel %vm1220, 1.0, 0.0
  %v1253 = vsel %vm1221, 1.0, 0.0
  %v1254 = vsel %vm1222, 1.0, 0.0
  %v1255 = vsel %vm1223, 1.0, 0.0
  %v1256 = vsel %vm1224, 1.0, 0.0
  %v1257 = vsel %vm1225, 1.0, 0.0
  %v1258 = vsel %vm1226, 1.0, 0.0
  %v1259 = vadd.f32 %v1114, %v1227
  %v1260 = vadd.f32 %v1115, %v1228
  %v1261 = vadd.f32 %v1116, %v1229
  %v1262 = vadd.f32 %v1117, %v1230
  %v1263 = vadd.f32 %v1118, %v1231
  %v1264 = vadd.f32 %v1119, %v1232
  %v1265 = vadd.f32 %v1120, %v1233
  %v1266 = vadd.f32 %v1121, %v1234
  %v1267 = vadd.f32 %v1122, %v1235
  %v1268 = vadd.f32 %v1123, %v1236
  %v1269 = vadd.f32 %v1124, %v1237
  %v1270 = vadd.f32 %v1125, %v1238
  %v1271 = vadd.f32 %v1126, %v1239
  %v1272 = vadd.f32 %v1127, %v1240
  %v1273 = vadd.f32 %v1128, %v1241
  %v1274 = vadd.f32 %v1129, %v1242
  %v1275 = vadd.f32 %v1130, %v1243
  %v1276 = vadd.f32 %v1131, %v1244
  %v1277 = vadd.f32 %v1132, %v1245
  %v1278 = vadd.f32 %v1133, %v1246
  %v1279 = vadd.f32 %v1134, %v1247
  %v1280 = vadd.f32 %v1135, %v1248
  %v1281 = vadd.f32 %v1136, %v1249
  %v1282 = vadd.f32 %v1137, %v1250
  %v1283 = vadd.f32 %v1138, %v1251
  %v1284 = vadd.f32 %v1139, %v1252
  %v1285 = vadd.f32 %v1140, %v1253
  %v1286 = vadd.f32 %v1141, %v1254
  %v1287 = vadd.f32 %v1142, %v1255
  %v1288 = vadd.f32 %v1143, %v1256
  %v1289 = vadd.f32 %v1144, %v1257
  %v1290 = vadd.f32 %v1145, %v1258
  %v1291 = vadd.s32 %v1016, 64
  %v1292 = vadd.s32 %v1017, 64
  %v1293 = vadd.s32 %v1018, 64
  %v1294 = vadd.s32 %v1019, 64
  %v1295 = vadd.s32 %v1020, 64
  %v1296 = vadd.s32 %v1021, 64
  %v1297 = vadd.s32 %v1022, 64
  %vm1298 = vcmp.eq.s32.totalorder %v1048, %v1023
  %vm1299 = vcmp.eq.s32.totalorder %v1049, %v1023
  %vm1300 = vcmp.eq.s32.totalorder %v1048, %v1291
  %vm1301 = vcmp.eq.s32.totalorder %v1049, %v1291
  %vm1302 = vcmp.eq.s32.totalorder %v1048, %v1292
  %vm1303 = vcmp.eq.s32.totalorder %v1049, %v1292
  %vm1304 = vcmp.eq.s32.totalorder %v1048, %v1293
  %vm1305 = vcmp.eq.s32.totalorder %v1049, %v1293
  %vm1306 = vcmp.eq.s32.totalorder %v1048, %v1294
  %vm1307 = vcmp.eq.s32.totalorder %v1049, %v1294
  %vm1308 = vcmp.eq.s32.totalorder %v1048, %v1295
  %vm1309 = vcmp.eq.s32.totalorder %v1049, %v1295
  %vm1310 = vcmp.eq.s32.totalorder %v1048, %v1296
  %vm1311 = vcmp.eq.s32.totalorder %v1049, %v1296
  %vm1312 = vcmp.eq.s32.totalorder %v1048, %v1297
  %vm1313 = vcmp.eq.s32.totalorder %v1049, %v1297
  %v1314 = vsel %vm1298, 1.0, 0.0
  %v1315 = vsel %vm1299, 1.0, 0.0
  %v1316 = vsel %vm1300, 1.0, 0.0
  %v1317 = vsel %vm1301, 1.0, 0.0
  %v1318 = vsel %vm1302, 1.0, 0.0
  %v1319 = vsel %vm1303, 1.0, 0.0
  %v1320 = vsel %vm1304, 1.0, 0.0
  %v1321 = vsel %vm1305, 1.0, 0.0
  %v1322 = vsel %vm1306, 1.0, 0.0
  %v1323 = vsel %vm1307, 1.0, 0.0
  %v1324 = vsel %vm1308, 1.0, 0.0
  %v1325 = vsel %vm1309, 1.0, 0.0
  %v1326 = vsel %vm1310, 1.0, 0.0
  %v1327 = vsel %vm1311, 1.0, 0.0
  %v1328 = vsel %vm1312, 1.0, 0.0
  %v1329 = vsel %vm1313, 1.0, 0.0
  %v1330 = vadd.f32 %v1178, %v1314
  %v1331 = vadd.f32 %v1179, %v1315
  %v1332 = vadd.f32 %v1180, %v1316
  %v1333 = vadd.f32 %v1181, %v1317
  %v1334 = vadd.f32 %v1182, %v1318
  %v1335 = vadd.f32 %v1183, %v1319
  %v1336 = vadd.f32 %v1184, %v1320
  %v1337 = vadd.f32 %v1185, %v1321
  %v1338 = vadd.f32 %v1186, %v1322
  %v1339 = vadd.f32 %v1187, %v1323
  %v1340 = vadd.f32 %v1188, %v1324
  %v1341 = vadd.f32 %v1189, %v1325
  %v1342 = vadd.f32 %v1190, %v1326
  %v1343 = vadd.f32 %v1191, %v1327
  %v1344 = vadd.f32 %v1192, %v1328
  %v1345 = vadd.f32 %v1193, %v1329
  %vm1346 = vcmp.eq.s32.totalorder %v1015, %v1049
  %vm1347 = vcmp.eq.s32.totalorder %v1016, %v1049
  %vm1348 = vcmp.eq.s32.totalorder %v1017, %v1049
  %vm1349 = vcmp.eq.s32.totalorder %v1018, %v1049
  %vm1350 = vcmp.eq.s32.totalorder %v1019, %v1049
  %vm1351 = vcmp.eq.s32.totalorder %v1020, %v1049
  %vm1352 = vcmp.eq.s32.totalorder %v1021, %v1049
  %vm1353 = vcmp.eq.s32.totalorder %v1022, %v1049
  %vm1354 = vcmp.eq.s32.totalorder %v1023, %v1049
  %vm1355 = vcmp.eq.s32.totalorder %v1024, %v1049
  %vm1356 = vcmp.eq.s32.totalorder %v1025, %v1049
  %vm1357 = vcmp.eq.s32.totalorder %v1026, %v1049
  %vm1358 = vcmp.eq.s32.totalorder %v1027, %v1049
  %vm1359 = vcmp.eq.s32.totalorder %v1028, %v1049
  %vm1360 = vcmp.eq.s32.totalorder %v1029, %v1049
  %vm1361 = vcmp.eq.s32.totalorder %v1030, %v1049
  %vm1362 = vcmp.eq.s32.totalorder %v1031, %v1049
  %vm1363 = vcmp.eq.s32.totalorder %v1032, %v1049
  %vm1364 = vcmp.eq.s32.totalorder %v1033, %v1049
  %vm1365 = vcmp.eq.s32.totalorder %v1034, %v1049
  %vm1366 = vcmp.eq.s32.totalorder %v1035, %v1049
  %vm1367 = vcmp.eq.s32.totalorder %v1036, %v1049
  %vm1368 = vcmp.eq.s32.totalorder %v1037, %v1049
  %vm1369 = vcmp.eq.s32.totalorder %v1038, %v1049
  %vm1370 = vcmp.eq.s32.totalorder %v1039, %v1049
  %vm1371 = vcmp.eq.s32.totalorder %v1040, %v1049
  %vm1372 = vcmp.eq.s32.totalorder %v1041, %v1049
  %vm1373 = vcmp.eq.s32.totalorder %v1042, %v1049
  %vm1374 = vcmp.eq.s32.totalorder %v1043, %v1049
  %vm1375 = vcmp.eq.s32.totalorder %v1044, %v1049
  %vm1376 = vcmp.eq.s32.totalorder %v1045, %v1049
  %vm1377 = vcmp.eq.s32.totalorder %v1046, %v1049
  %v1378 = vsel %vm1346, 1.0, 0.0
  %v1379 = vsel %vm1347, 1.0, 0.0
  %v1380 = vsel %vm1348, 1.0, 0.0
  %v1381 = vsel %vm1349, 1.0, 0.0
  %v1382 = vsel %vm1350, 1.0, 0.0
  %v1383 = vsel %vm1351, 1.0, 0.0
  %v1384 = vsel %vm1352, 1.0, 0.0
  %v1385 = vsel %vm1353, 1.0, 0.0
  %v1386 = vsel %vm1354, 1.0, 0.0
  %v1387 = vsel %vm1355, 1.0, 0.0
  %v1388 = vsel %vm1356, 1.0, 0.0
  %v1389 = vsel %vm1357, 1.0, 0.0
  %v1390 = vsel %vm1358, 1.0, 0.0
  %v1391 = vsel %vm1359, 1.0, 0.0
  %v1392 = vsel %vm1360, 1.0, 0.0
  %v1393 = vsel %vm1361, 1.0, 0.0
  %v1394 = vsel %vm1362, 1.0, 0.0
  %v1395 = vsel %vm1363, 1.0, 0.0
  %v1396 = vsel %vm1364, 1.0, 0.0
  %v1397 = vsel %vm1365, 1.0, 0.0
  %v1398 = vsel %vm1366, 1.0, 0.0
  %v1399 = vsel %vm1367, 1.0, 0.0
  %v1400 = vsel %vm1368, 1.0, 0.0
  %v1401 = vsel %vm1369, 1.0, 0.0
  %v1402 = vsel %vm1370, 1.0, 0.0
  %v1403 = vsel %vm1371, 1.0, 0.0
  %v1404 = vsel %vm1372, 1.0, 0.0
  %v1405 = vsel %vm1373, 1.0, 0.0
  %v1406 = vsel %vm1374, 1.0, 0.0
  %v1407 = vsel %vm1375, 1.0, 0.0
  %v1408 = vsel %vm1376, 1.0, 0.0
  %v1409 = vsel %vm1377, 1.0, 0.0
  %v1410 = vadd.f32 %v1259, %v1378
  %v1411 = vadd.f32 %v1260, %v1379
  %v1412 = vadd.f32 %v1261, %v1380
  %v1413 = vadd.f32 %v1262, %v1381
  %v1414 = vadd.f32 %v1263, %v1382
  %v1415 = vadd.f32 %v1264, %v1383
  %v1416 = vadd.f32 %v1265, %v1384
  %v1417 = vadd.f32 %v1266, %v1385
  %v1418 = vadd.f32 %v1267, %v1386
  %v1419 = vadd.f32 %v1268, %v1387
  %v1420 = vadd.f32 %v1269, %v1388
  %v1421 = vadd.f32 %v1270, %v1389
  %v1422 = vadd.f32 %v1271, %v1390
  %v1423 = vadd.f32 %v1272, %v1391
  %v1424 = vadd.f32 %v1273, %v1392
  %v1425 = vadd.f32 %v1274, %v1393
  %v1426 = vadd.f32 %v1275, %v1394
  %v1427 = vadd.f32 %v1276, %v1395
  %v1428 = vadd.f32 %v1277, %v1396
  %v1429 = vadd.f32 %v1278, %v1397
  %v1430 = vadd.f32 %v1279, %v1398
  %v1431 = vadd.f32 %v1280, %v1399
  %v1432 = vadd.f32 %v1281, %v1400
  %v1433 = vadd.f32 %v1282, %v1401
  %v1434 = vadd.f32 %v1283, %v1402
  %v1435 = vadd.f32 %v1284, %v1403
  %v1436 = vadd.f32 %v1285, %v1404
  %v1437 = vadd.f32 %v1286, %v1405
  %v1438 = vadd.f32 %v1287, %v1406
  %v1439 = vadd.f32 %v1288, %v1407
  %v1440 = vadd.f32 %v1289, %v1408
  %v1441 = vadd.f32 %v1290, %v1409
  %v1442 = vadd.s32 %v1016, 128
  %v1443 = vadd.s32 %v1017, 128
  %v1444 = vadd.s32 %v1018, 128
  %v1445 = vadd.s32 %v1019, 128
  %v1446 = vadd.s32 %v1020, 128
  %v1447 = vadd.s32 %v1021, 128
  %v1448 = vadd.s32 %v1022, 128
  %vm1449 = vcmp.eq.s32.totalorder %v1048, %v1031
  %vm1450 = vcmp.eq.s32.totalorder %v1049, %v1031
  %vm1451 = vcmp.eq.s32.totalorder %v1048, %v1442
  %vm1452 = vcmp.eq.s32.totalorder %v1049, %v1442
  %vm1453 = vcmp.eq.s32.totalorder %v1048, %v1443
  %vm1454 = vcmp.eq.s32.totalorder %v1049, %v1443
  %vm1455 = vcmp.eq.s32.totalorder %v1048, %v1444
  %vm1456 = vcmp.eq.s32.totalorder %v1049, %v1444
  %vm1457 = vcmp.eq.s32.totalorder %v1048, %v1445
  %vm1458 = vcmp.eq.s32.totalorder %v1049, %v1445
  %vm1459 = vcmp.eq.s32.totalorder %v1048, %v1446
  %vm1460 = vcmp.eq.s32.totalorder %v1049, %v1446
  %vm1461 = vcmp.eq.s32.totalorder %v1048, %v1447
  %vm1462 = vcmp.eq.s32.totalorder %v1049, %v1447
  %vm1463 = vcmp.eq.s32.totalorder %v1048, %v1448
  %vm1464 = vcmp.eq.s32.totalorder %v1049, %v1448
  %v1465 = vsel %vm1449, 1.0, 0.0
  %v1466 = vsel %vm1450, 1.0, 0.0
  %v1467 = vsel %vm1451, 1.0, 0.0
  %v1468 = vsel %vm1452, 1.0, 0.0
  %v1469 = vsel %vm1453, 1.0, 0.0
  %v1470 = vsel %vm1454, 1.0, 0.0
  %v1471 = vsel %vm1455, 1.0, 0.0
  %v1472 = vsel %vm1456, 1.0, 0.0
  %v1473 = vsel %vm1457, 1.0, 0.0
  %v1474 = vsel %vm1458, 1.0, 0.0
  %v1475 = vsel %vm1459, 1.0, 0.0
  %v1476 = vsel %vm1460, 1.0, 0.0
  %v1477 = vsel %vm1461, 1.0, 0.0
  %v1478 = vsel %vm1462, 1.0, 0.0
  %v1479 = vsel %vm1463, 1.0, 0.0
  %v1480 = vsel %vm1464, 1.0, 0.0
  %v1481 = vadd.f32 %v1330, %v1465
  %v1482 = vadd.f32 %v1331, %v1466
  %v1483 = vadd.f32 %v1332, %v1467
  %v1484 = vadd.f32 %v1333, %v1468
  %v1485 = vadd.f32 %v1334, %v1469
  %v1486 = vadd.f32 %v1335, %v1470
  %v1487 = vadd.f32 %v1336, %v1471
  %v1488 = vadd.f32 %v1337, %v1472
  %v1489 = vadd.f32 %v1338, %v1473
  %v1490 = vadd.f32 %v1339, %v1474
  %v1491 = vadd.f32 %v1340, %v1475
  %v1492 = vadd.f32 %v1341, %v1476
  %v1493 = vadd.f32 %v1342, %v1477
  %v1494 = vadd.f32 %v1343, %v1478
  %v1495 = vadd.f32 %v1344, %v1479
  %v1496 = vadd.f32 %v1345, %v1480
  %v1497 = vadd.s32 %v1048, 192
  %vm1498 = vcmp.eq.s32.totalorder %v1015, %v1497
  %vm1499 = vcmp.eq.s32.totalorder %v1016, %v1497
  %vm1500 = vcmp.eq.s32.totalorder %v1017, %v1497
  %vm1501 = vcmp.eq.s32.totalorder %v1018, %v1497
  %vm1502 = vcmp.eq.s32.totalorder %v1019, %v1497
  %vm1503 = vcmp.eq.s32.totalorder %v1020, %v1497
  %vm1504 = vcmp.eq.s32.totalorder %v1021, %v1497
  %vm1505 = vcmp.eq.s32.totalorder %v1022, %v1497
  %vm1506 = vcmp.eq.s32.totalorder %v1023, %v1497
  %vm1507 = vcmp.eq.s32.totalorder %v1024, %v1497
  %vm1508 = vcmp.eq.s32.totalorder %v1025, %v1497
  %vm1509 = vcmp.eq.s32.totalorder %v1026, %v1497
  %vm1510 = vcmp.eq.s32.totalorder %v1027, %v1497
  %vm1511 = vcmp.eq.s32.totalorder %v1028, %v1497
  %vm1512 = vcmp.eq.s32.totalorder %v1029, %v1497
  %vm1513 = vcmp.eq.s32.totalorder %v1030, %v1497
  %vm1514 = vcmp.eq.s32.totalorder %v1031, %v1497
  %vm1515 = vcmp.eq.s32.totalorder %v1032, %v1497
  %vm1516 = vcmp.eq.s32.totalorder %v1033, %v1497
  %vm1517 = vcmp.eq.s32.totalorder %v1034, %v1497
  %vm1518 = vcmp.eq.s32.totalorder %v1035, %v1497
  %vm1519 = vcmp.eq.s32.totalorder %v1036, %v1497
  %vm1520 = vcmp.eq.s32.totalorder %v1037, %v1497
  %vm1521 = vcmp.eq.s32.totalorder %v1038, %v1497
  %vm1522 = vcmp.eq.s32.totalorder %v1039, %v1497
  %vm1523 = vcmp.eq.s32.totalorder %v1040, %v1497
  %vm1524 = vcmp.eq.s32.totalorder %v1041, %v1497
  %vm1525 = vcmp.eq.s32.totalorder %v1042, %v1497
  %vm1526 = vcmp.eq.s32.totalorder %v1043, %v1497
  %vm1527 = vcmp.eq.s32.totalorder %v1044, %v1497
  %vm1528 = vcmp.eq.s32.totalorder %v1045, %v1497
  %vm1529 = vcmp.eq.s32.totalorder %v1046, %v1497
  %v1530 = vsel %vm1498, 1.0, 0.0
  %v1531 = vsel %vm1499, 1.0, 0.0
  %v1532 = vsel %vm1500, 1.0, 0.0
  %v1533 = vsel %vm1501, 1.0, 0.0
  %v1534 = vsel %vm1502, 1.0, 0.0
  %v1535 = vsel %vm1503, 1.0, 0.0
  %v1536 = vsel %vm1504, 1.0, 0.0
  %v1537 = vsel %vm1505, 1.0, 0.0
  %v1538 = vsel %vm1506, 1.0, 0.0
  %v1539 = vsel %vm1507, 1.0, 0.0
  %v1540 = vsel %vm1508, 1.0, 0.0
  %v1541 = vsel %vm1509, 1.0, 0.0
  %v1542 = vsel %vm1510, 1.0, 0.0
  %v1543 = vsel %vm1511, 1.0, 0.0
  %v1544 = vsel %vm1512, 1.0, 0.0
  %v1545 = vsel %vm1513, 1.0, 0.0
  %v1546 = vsel %vm1514, 1.0, 0.0
  %v1547 = vsel %vm1515, 1.0, 0.0
  %v1548 = vsel %vm1516, 1.0, 0.0
  %v1549 = vsel %vm1517, 1.0, 0.0
  %v1550 = vsel %vm1518, 1.0, 0.0
  %v1551 = vsel %vm1519, 1.0, 0.0
  %v1552 = vsel %vm1520, 1.0, 0.0
  %v1553 = vsel %vm1521, 1.0, 0.0
  %v1554 = vsel %vm1522, 1.0, 0.0
  %v1555 = vsel %vm1523, 1.0, 0.0
  %v1556 = vsel %vm1524, 1.0, 0.0
  %v1557 = vsel %vm1525, 1.0, 0.0
  %v1558 = vsel %vm1526, 1.0, 0.0
  %v1559 = vsel %vm1527, 1.0, 0.0
  %v1560 = vsel %vm1528, 1.0, 0.0
  %v1561 = vsel %vm1529, 1.0, 0.0
  %v1562 = vadd.f32 %v1410, %v1530
  %v1563 = vadd.f32 %v1411, %v1531
  %v1564 = vadd.f32 %v1412, %v1532
  %v1565 = vadd.f32 %v1413, %v1533
  %v1566 = vadd.f32 %v1414, %v1534
  %v1567 = vadd.f32 %v1415, %v1535
  %v1568 = vadd.f32 %v1416, %v1536
  %v1569 = vadd.f32 %v1417, %v1537
  %v1570 = vadd.f32 %v1418, %v1538
  %v1571 = vadd.f32 %v1419, %v1539
  %v1572 = vadd.f32 %v1420, %v1540
  %v1573 = vadd.f32 %v1421, %v1541
  %v1574 = vadd.f32 %v1422, %v1542
  %v1575 = vadd.f32 %v1423, %v1543
  %v1576 = vadd.f32 %v1424, %v1544
  %v1577 = vadd.f32 %v1425, %v1545
  %v1578 = vadd.f32 %v1426, %v1546
  %v1579 = vadd.f32 %v1427, %v1547
  %v1580 = vadd.f32 %v1428, %v1548
  %v1581 = vadd.f32 %v1429, %v1549
  %v1582 = vadd.f32 %v1430, %v1550
  %v1583 = vadd.f32 %v1431, %v1551
  %v1584 = vadd.f32 %v1432, %v1552
  %v1585 = vadd.f32 %v1433, %v1553
  %v1586 = vadd.f32 %v1434, %v1554
  %v1587 = vadd.f32 %v1435, %v1555
  %v1588 = vadd.f32 %v1436, %v1556
  %v1589 = vadd.f32 %v1437, %v1557
  %v1590 = vadd.f32 %v1438, %v1558
  %v1591 = vadd.f32 %v1439, %v1559
  %v1592 = vadd.f32 %v1440, %v1560
  %v1593 = vadd.f32 %v1441, %v1561
  %v1594 = vadd.s32 %v1016, 192
  %v1595 = vadd.s32 %v1017, 192
  %v1596 = vadd.s32 %v1018, 192
  %v1597 = vadd.s32 %v1019, 192
  %v1598 = vadd.s32 %v1020, 192
  %v1599 = vadd.s32 %v1021, 192
  %v1600 = vadd.s32 %v1022, 192
  %vm1601 = vcmp.eq.s32.totalorder %v1048, %v1039
  %vm1602 = vcmp.eq.s32.totalorder %v1049, %v1039
  %vm1603 = vcmp.eq.s32.totalorder %v1048, %v1594
  %vm1604 = vcmp.eq.s32.totalorder %v1049, %v1594
  %vm1605 = vcmp.eq.s32.totalorder %v1048, %v1595
  %vm1606 = vcmp.eq.s32.totalorder %v1049, %v1595
  %vm1607 = vcmp.eq.s32.totalorder %v1048, %v1596
  %vm1608 = vcmp.eq.s32.totalorder %v1049, %v1596
  %vm1609 = vcmp.eq.s32.totalorder %v1048, %v1597
  %vm1610 = vcmp.eq.s32.totalorder %v1049, %v1597
  %vm1611 = vcmp.eq.s32.totalorder %v1048, %v1598
  %vm1612 = vcmp.eq.s32.totalorder %v1049, %v1598
  %vm1613 = vcmp.eq.s32.totalorder %v1048, %v1599
  %vm1614 = vcmp.eq.s32.totalorder %v1049, %v1599
  %vm1615 = vcmp.eq.s32.totalorder %v1048, %v1600
  %vm1616 = vcmp.eq.s32.totalorder %v1049, %v1600
  %v1617 = vsel %vm1601, 1.0, 0.0
  %v1618 = vsel %vm1602, 1.0, 0.0
  %v1619 = vsel %vm1603, 1.0, 0.0
  %v1620 = vsel %vm1604, 1.0, 0.0
  %v1621 = vsel %vm1605, 1.0, 0.0
  %v1622 = vsel %vm1606, 1.0, 0.0
  %v1623 = vsel %vm1607, 1.0, 0.0
  %v1624 = vsel %vm1608, 1.0, 0.0
  %v1625 = vsel %vm1609, 1.0, 0.0
  %v1626 = vsel %vm1610, 1.0, 0.0
  %v1627 = vsel %vm1611, 1.0, 0.0
  %v1628 = vsel %vm1612, 1.0, 0.0
  %v1629 = vsel %vm1613, 1.0, 0.0
  %v1630 = vsel %vm1614, 1.0, 0.0
  %v1631 = vsel %vm1615, 1.0, 0.0
  %v1632 = vsel %vm1616, 1.0, 0.0
  %v1633 = vadd.f32 %v1481, %v1617
  %v1634 = vadd.f32 %v1482, %v1618
  %v1635 = vadd.f32 %v1483, %v1619
  %v1636 = vadd.f32 %v1484, %v1620
  %v1637 = vadd.f32 %v1485, %v1621
  %v1638 = vadd.f32 %v1486, %v1622
  %v1639 = vadd.f32 %v1487, %v1623
  %v1640 = vadd.f32 %v1488, %v1624
  %v1641 = vadd.f32 %v1489, %v1625
  %v1642 = vadd.f32 %v1490, %v1626
  %v1643 = vadd.f32 %v1491, %v1627
  %v1644 = vadd.f32 %v1492, %v1628
  %v1645 = vadd.f32 %v1493, %v1629
  %v1646 = vadd.f32 %v1494, %v1630
  %v1647 = vadd.f32 %v1495, %v1631
  %v1648 = vadd.f32 %v1496, %v1632
  %vm1649 = vcmask 1041408
  %v1650 = vsel %vm1649, %v1008, 0.0
  %v1651 = vrot.slane %v1650, 4
  %v1652 = vadd.f32 %v1650, %v1651
  %v1653 = vrot.slane %v1652, 2
  %v1654 = vadd.f32 %v1652, %v1653
  %v1655 = vrot.slane %v1654, 1
  %v1656 = vadd.f32 %v1654, %v1655
  %v1657 = vsel %vm1649, %v1010, 0.0
  %v1658 = vrot.slane %v1657, 4
  %v1659 = vadd.f32 %v1657, %v1658
  %v1660 = vrot.slane %v1659, 2
  %v1661 = vadd.f32 %v1659, %v1660
  %v1662 = vrot.slane %v1661, 1
  %v1663 = vadd.f32 %v1661, %v1662
  %1664 = vmatprep.subr.mxu0 0.0
  %1665 = vmatpush1.msra.mxu0 %v1562
  %1666 = vmatprep.subr.mxu0 0.0
  %1667 = vmatpush1.msra.mxu0 %v1563
  %1668 = vmatprep.subr.mxu0 0.0
  %1669 = vmatpush1.msra.mxu0 %v1564
  %1670 = vmatprep.subr.mxu0 0.0
  %1671 = vmatpush1.msra.mxu0 %v1565
  %1672 = vmatprep.subr.mxu0 0.0
  %1673 = vmatpush1.msra.mxu0 %v1566
  %1674 = vmatprep.subr.mxu0 0.0
  %1675 = vmatpush1.msra.mxu0 %v1567
  %1676 = vmatprep.subr.mxu0 0.0
  %1677 = vmatpush1.msra.mxu0 %v1568
  %1678 = vmatprep.subr.mxu0 0.0
  %1679 = vmatpush1.msra.mxu0 %v1569
  %1680 = vmatprep.subr.mxu0 0.0
  %1681 = vmatpush1.msra.mxu0 %v1570
  %1682 = vmatprep.subr.mxu0 0.0
  %1683 = vmatpush1.msra.mxu0 %v1571
  %1684 = vmatprep.subr.mxu0 0.0
  %1685 = vmatpush1.msra.mxu0 %v1572
  %1686 = vmatprep.subr.mxu0 0.0
  %1687 = vmatpush1.msra.mxu0 %v1573
  %1688 = vmatprep.subr.mxu0 0.0
  %1689 = vmatpush1.msra.mxu0 %v1574
  %1690 = vmatprep.subr.mxu0 0.0
  %1691 = vmatpush1.msra.mxu0 %v1575
  %1692 = vmatprep.subr.mxu0 0.0
  %1693 = vmatpush1.msra.mxu0 %v1576
  %1694 = vmatprep.subr.mxu0 0.0
  %1695 = vmatpush1.msra.mxu0 %v1577
  %1696 = vmatprep.subr.mxu0 0.0
  %1697 = vmatpush1.msra.mxu0 %v1578
  %1698 = vmatprep.subr.mxu0 0.0
  %1699 = vmatpush1.msra.mxu0 %v1579
  %1700 = vmatprep.subr.mxu0 0.0
  %1701 = vmatpush1.msra.mxu0 %v1580
  %1702 = vmatprep.subr.mxu0 0.0
  %1703 = vmatpush1.msra.mxu0 %v1581
  %1704 = vmatprep.subr.mxu0 0.0
  %1705 = vmatpush1.msra.mxu0 %v1582
  %1706 = vmatprep.subr.mxu0 0.0
  %1707 = vmatpush1.msra.mxu0 %v1583
  %1708 = vmatprep.subr.mxu0 0.0
  %1709 = vmatpush1.msra.mxu0 %v1584
  %1710 = vmatprep.subr.mxu0 0.0
  %1711 = vmatpush1.msra.mxu0 %v1585
  %1712 = vmatprep.subr.mxu0 0.0
  %1713 = vmatpush1.msra.mxu0 %v1586
  %1714 = vmatprep.subr.mxu0 0.0
  %1715 = vmatpush1.msra.mxu0 %v1587
  %1716 = vmatprep.subr.mxu0 0.0
  %1717 = vmatpush1.msra.mxu0 %v1588
  %1718 = vmatprep.subr.mxu0 0.0
  %1719 = vmatpush1.msra.mxu0 %v1589
  %1720 = vmatprep.subr.mxu0 0.0
  %1721 = vmatpush1.msra.mxu0 %v1590
  %1722 = vmatprep.subr.mxu0 0.0
  %1723 = vmatpush1.msra.mxu0 %v1591
  %1724 = vmatprep.subr.mxu0 0.0
  %1725 = vmatpush1.msra.mxu0 %v1592
  %1726 = vmatprep.subr.mxu0 0.0
  %1727 = vmatpush1.msra.mxu0 %v1593
  %1728 = vmatprep.mubr.f32.mxu0 %v1663
  %1729 = vmatmul.mubr.f32.gmra.mrb[0].mxu0 %v1656
  %v1730 = vpop.f32.mrb[0].mxu0
  %v1731 = vadd.f32 0.0, %v1730
  %v1732 = vpop.f32.mrb[0].mxu0
  %1733 = vdwg.mxu0
  %v1734 = vmul.f32 %v1731, 0.125
  %v1736 = vsel %vm564, %v1734, 0
  %1738 = vmatprep.subr.mxu0 %v1634
  %1739 = vmatpush1.msra.mxu0 %v1633
  %1740 = vmatprep.subr.mxu0 %v1636
  %1741 = vmatpush1.msra.mxu0 %v1635
  %1742 = vmatprep.subr.mxu0 %v1638
  %1743 = vmatpush1.msra.mxu0 %v1637
  %1744 = vmatprep.subr.mxu0 %v1640
  %1745 = vmatpush1.msra.mxu0 %v1639
  %1746 = vmatprep.subr.mxu0 %v1642
  %1747 = vmatpush1.msra.mxu0 %v1641
  %1748 = vmatprep.subr.mxu0 %v1644
  %1749 = vmatpush1.msra.mxu0 %v1643
  %1750 = vmatprep.subr.mxu0 %v1646
  %1751 = vmatpush1.msra.mxu0 %v1645
  %1752 = vmatprep.subr.mxu0 %v1648
  %1753 = vmatpush1.msra.mxu0 %v1647
  %1754 = vmatprep.subr.mxu0 0.0
  %1755 = vmatpush1.msra.mxu0 0.0
  %1756 = vmatprep.subr.mxu0 0.0
  %1757 = vmatpush1.msra.mxu0 0.0
  %1758 = vmatprep.subr.mxu0 0.0
  %1759 = vmatpush1.msra.mxu0 0.0
  %1760 = vmatprep.subr.mxu0 0.0
  %1761 = vmatpush1.msra.mxu0 0.0
  %1762 = vmatprep.subr.mxu0 0.0
  %1763 = vmatpush1.msra.mxu0 0.0
  %1764 = vmatprep.subr.mxu0 0.0
  %1765 = vmatpush1.msra.mxu0 0.0
  %1766 = vmatprep.subr.mxu0 0.0
  %1767 = vmatpush1.msra.mxu0 0.0
  %1768 = vmatprep.subr.mxu0 0.0
  %1769 = vmatpush1.msra.mxu0 0.0
  %1770 = vmatprep.subr.mxu0 0.0
  %1771 = vmatpush1.msra.mxu0 0.0
  %1772 = vmatprep.subr.mxu0 0.0
  %1773 = vmatpush1.msra.mxu0 0.0
  %1774 = vmatprep.subr.mxu0 0.0
  %1775 = vmatpush1.msra.mxu0 0.0
  %1776 = vmatprep.subr.mxu0 0.0
  %1777 = vmatpush1.msra.mxu0 0.0
  %1778 = vmatprep.subr.mxu0 0.0
  %1779 = vmatpush1.msra.mxu0 0.0
  %1780 = vmatprep.subr.mxu0 0.0
  %1781 = vmatpush1.msra.mxu0 0.0
  %1782 = vmatprep.subr.mxu0 0.0
  %1783 = vmatpush1.msra.mxu0 0.0
  %1784 = vmatprep.subr.mxu0 0.0
  %1785 = vmatpush1.msra.mxu0 0.0
  %1786 = vmatprep.subr.mxu0 0.0
  %1787 = vmatpush1.msra.mxu0 0.0
  %1788 = vmatprep.subr.mxu0 0.0
  %1789 = vmatpush1.msra.mxu0 0.0
  %1790 = vmatprep.subr.mxu0 0.0
  %1791 = vmatpush1.msra.mxu0 0.0
  %1792 = vmatprep.subr.mxu0 0.0
  %1793 = vmatpush1.msra.mxu0 0.0
  %1794 = vmatprep.subr.mxu0 0.0
  %1795 = vmatpush1.msra.mxu0 0.0
  %1796 = vmatprep.subr.mxu0 0.0
  %1797 = vmatpush1.msra.mxu0 0.0
  %1798 = vmatprep.subr.mxu0 0.0
  %1799 = vmatpush1.msra.mxu0 0.0
  %1800 = vmatprep.subr.mxu0 0.0
  %1801 = vmatpush1.msra.mxu0 0.0
  %1802 = vmatprep.mubr.f32.mxu0 0.0
  %1803 = vmatmul.mubr.f32.gmra.mrb[0].mxu0 %v1736
  %v1804 = vpop.f32.mrb[0].mxu0
  %v1805 = vadd.f32 0.0, %v1804
  %v1806 = vpop.f32.mrb[0].mxu0
  %v1807 = vadd.f32 0.0, %v1806
  %1808 = vdwg.mxu0
  %v1809 = vlaneseq
  %v1810 = vshrl.u32 %v1809, 7
  %v1811 = vsub.s32 0, %v1810
  %v1812 = vrot.slane %v1805, %v1811
  %v1813 = vlaneseq
  %v1814 = vshrl.u32 %v1813, 7
  %v1815 = vsub.s32 0, %v1814
  %v1816 = vrot.slane %v1807, %v1815
  %v1817 = vsub.f32 %v1008, %v1812
  %v1818 = vsub.f32 %v1010, %v1816
  %v1819 = vmul.f32 %v1817, %v1817
  %v1820 = vmul.f32 %v1818, %v1818
  %v1821 = vsel %vm1649, %v1819, 0.0
  %v1822 = vrot.slane %v1821, 4
  %v1823 = vadd.f32 %v1821, %v1822
  %v1824 = vrot.slane %v1823, 2
  %v1825 = vadd.f32 %v1823, %v1824
  %v1826 = vrot.slane %v1825, 1
  %v1827 = vadd.f32 %v1825, %v1826
  %v1828 = vsel %vm1649, %v1820, 0.0
  %v1829 = vrot.slane %v1828, 4
  %v1830 = vadd.f32 %v1828, %v1829
  %v1831 = vrot.slane %v1830, 2
  %v1832 = vadd.f32 %v1830, %v1831
  %v1833 = vrot.slane %v1832, 1
  %v1834 = vadd.f32 %v1832, %v1833
  %1835 = vmatprep.subr.mxu0 0.0
  %1836 = vmatpush1.msra.mxu0 %v1562
  %1837 = vmatprep.subr.mxu0 0.0
  %1838 = vmatpush1.msra.mxu0 %v1563
  %1839 = vmatprep.subr.mxu0 0.0
  %1840 = vmatpush1.msra.mxu0 %v1564
  %1841 = vmatprep.subr.mxu0 0.0
  %1842 = vmatpush1.msra.mxu0 %v1565
  %1843 = vmatprep.subr.mxu0 0.0
  %1844 = vmatpush1.msra.mxu0 %v1566
  %1845 = vmatprep.subr.mxu0 0.0
  %1846 = vmatpush1.msra.mxu0 %v1567
  %1847 = vmatprep.subr.mxu0 0.0
  %1848 = vmatpush1.msra.mxu0 %v1568
  %1849 = vmatprep.subr.mxu0 0.0
  %1850 = vmatpush1.msra.mxu0 %v1569
  %1851 = vmatprep.subr.mxu0 0.0
  %1852 = vmatpush1.msra.mxu0 %v1570
  %1853 = vmatprep.subr.mxu0 0.0
  %1854 = vmatpush1.msra.mxu0 %v1571
  %1855 = vmatprep.subr.mxu0 0.0
  %1856 = vmatpush1.msra.mxu0 %v1572
  %1857 = vmatprep.subr.mxu0 0.0
  %1858 = vmatpush1.msra.mxu0 %v1573
  %1859 = vmatprep.subr.mxu0 0.0
  %1860 = vmatpush1.msra.mxu0 %v1574
  %1861 = vmatprep.subr.mxu0 0.0
  %1862 = vmatpush1.msra.mxu0 %v1575
  %1863 = vmatprep.subr.mxu0 0.0
  %1864 = vmatpush1.msra.mxu0 %v1576
  %1865 = vmatprep.subr.mxu0 0.0
  %1866 = vmatpush1.msra.mxu0 %v1577
  %1867 = vmatprep.subr.mxu0 0.0
  %1868 = vmatpush1.msra.mxu0 %v1578
  %1869 = vmatprep.subr.mxu0 0.0
  %1870 = vmatpush1.msra.mxu0 %v1579
  %1871 = vmatprep.subr.mxu0 0.0
  %1872 = vmatpush1.msra.mxu0 %v1580
  %1873 = vmatprep.subr.mxu0 0.0
  %1874 = vmatpush1.msra.mxu0 %v1581
  %1875 = vmatprep.subr.mxu0 0.0
  %1876 = vmatpush1.msra.mxu0 %v1582
  %1877 = vmatprep.subr.mxu0 0.0
  %1878 = vmatpush1.msra.mxu0 %v1583
  %1879 = vmatprep.subr.mxu0 0.0
  %1880 = vmatpush1.msra.mxu0 %v1584
  %1881 = vmatprep.subr.mxu0 0.0
  %1882 = vmatpush1.msra.mxu0 %v1585
  %1883 = vmatprep.subr.mxu0 0.0
  %1884 = vmatpush1.msra.mxu0 %v1586
  %1885 = vmatprep.subr.mxu0 0.0
  %1886 = vmatpush1.msra.mxu0 %v1587
  %1887 = vmatprep.subr.mxu0 0.0
  %1888 = vmatpush1.msra.mxu0 %v1588
  %1889 = vmatprep.subr.mxu0 0.0
  %1890 = vmatpush1.msra.mxu0 %v1589
  %1891 = vmatprep.subr.mxu0 0.0
  %1892 = vmatpush1.msra.mxu0 %v1590
  %1893 = vmatprep.subr.mxu0 0.0
  %1894 = vmatpush1.msra.mxu0 %v1591
  %1895 = vmatprep.subr.mxu0 0.0
  %1896 = vmatpush1.msra.mxu0 %v1592
  %1897 = vmatprep.subr.mxu0 0.0
  %1898 = vmatpush1.msra.mxu0 %v1593
  %1899 = vmatprep.mubr.f32.mxu0 %v1834
  %1900 = vmatmul.mubr.f32.gmra.mrb[0].mxu0 %v1827
  %v1901 = vpop.f32.mrb[0].mxu0
  %v1902 = vadd.f32 0.0, %v1901
  %v1903 = vpop.f32.mrb[0].mxu0
  %1904 = vdwg.mxu0
  %v1905 = vmul.f32 %v1902, 0.125
  %v1906 = vld [vmem:[%s7] sm:$0x1]
  %v1907 = vadd.f32 %v1905, 1e-05
  %v1908 = vrsqrt.pop %v1907
  %v1909 = vmul.f32 %v1906, %v1908
  %v1911 = vsel %vm564, %v1909, 0
  %1913 = vmatprep.subr.mxu0 %v1634
  %1914 = vmatpush1.msra.mxu0 %v1633
  %1915 = vmatprep.subr.mxu0 %v1636
  %1916 = vmatpush1.msra.mxu0 %v1635
  %1917 = vmatprep.subr.mxu0 %v1638
  %1918 = vmatpush1.msra.mxu0 %v1637
  %1919 = vmatprep.subr.mxu0 %v1640
  %1920 = vmatpush1.msra.mxu0 %v1639
  %1921 = vmatprep.subr.mxu0 %v1642
  %1922 = vmatpush1.msra.mxu0 %v1641
  %1923 = vmatprep.subr.mxu0 %v1644
  %1924 = vmatpush1.msra.mxu0 %v1643
  %1925 = vmatprep.subr.mxu0 %v1646
  %1926 = vmatpush1.msra.mxu0 %v1645
  %1927 = vmatprep.subr.mxu0 %v1648
  %1928 = vmatpush1.msra.mxu0 %v1647
  %1929 = vmatprep.subr.mxu0 0.0
  %1930 = vmatpush1.msra.mxu0 0.0
  %1931 = vmatprep.subr.mxu0 0.0
  %1932 = vmatpush1.msra.mxu0 0.0
  %1933 = vmatprep.subr.mxu0 0.0
  %1934 = vmatpush1.msra.mxu0 0.0
  %1935 = vmatprep.subr.mxu0 0.0
  %1936 = vmatpush1.msra.mxu0 0.0
  %1937 = vmatprep.subr.mxu0 0.0
  %1938 = vmatpush1.msra.mxu0 0.0
  %1939 = vmatprep.subr.mxu0 0.0
  %1940 = vmatpush1.msra.mxu0 0.0
  %1941 = vmatprep.subr.mxu0 0.0
  %1942 = vmatpush1.msra.mxu0 0.0
  %1943 = vmatprep.subr.mxu0 0.0
  %1944 = vmatpush1.msra.mxu0 0.0
  %1945 = vmatprep.subr.mxu0 0.0
  %1946 = vmatpush1.msra.mxu0 0.0
  %1947 = vmatprep.subr.mxu0 0.0
  %1948 = vmatpush1.msra.mxu0 0.0
  %1949 = vmatprep.subr.mxu0 0.0
  %1950 = vmatpush1.msra.mxu0 0.0
  %1951 = vmatprep.subr.mxu0 0.0
  %1952 = vmatpush1.msra.mxu0 0.0
  %1953 = vmatprep.subr.mxu0 0.0
  %1954 = vmatpush1.msra.mxu0 0.0
  %1955 = vmatprep.subr.mxu0 0.0
  %1956 = vmatpush1.msra.mxu0 0.0
  %1957 = vmatprep.subr.mxu0 0.0
  %1958 = vmatpush1.msra.mxu0 0.0
  %1959 = vmatprep.subr.mxu0 0.0
  %1960 = vmatpush1.msra.mxu0 0.0
  %1961 = vmatprep.subr.mxu0 0.0
  %1962 = vmatpush1.msra.mxu0 0.0
  %1963 = vmatprep.subr.mxu0 0.0
  %1964 = vmatpush1.msra.mxu0 0.0
  %1965 = vmatprep.subr.mxu0 0.0
  %1966 = vmatpush1.msra.mxu0 0.0
  %1967 = vmatprep.subr.mxu0 0.0
  %1968 = vmatpush1.msra.mxu0 0.0
  %1969 = vmatprep.subr.mxu0 0.0
  %1970 = vmatpush1.msra.mxu0 0.0
  %1971 = vmatprep.subr.mxu0 0.0
  %1972 = vmatpush1.msra.mxu0 0.0
  %1973 = vmatprep.subr.mxu0 0.0
  %1974 = vmatpush1.msra.mxu0 0.0
  %1975 = vmatprep.subr.mxu0 0.0
  %1976 = vmatpush1.msra.mxu0 0.0
  %1977 = vmatprep.mubr.f32.mxu0 0.0
  %1978 = vmatmul.mubr.f32.gmra.mrb[0].mxu0 %v1911
  %v1979 = vpop.f32.mrb[0].mxu0
  %v1980 = vadd.f32 0.0, %v1979
  %v1981 = vpop.f32.mrb[0].mxu0
  %v1982 = vadd.f32 0.0, %v1981
  %1983 = vdwg.mxu0
  %v1984 = vld [vmem:[%s8] sm:$0x1]
  %v1986 = vsel %vm564, %v1984, 0
  %1988 = vmatprep.subr.mxu0 %v1634
  %1989 = vmatpush1.msra.mxu0 %v1633
  %1990 = vmatprep.subr.mxu0 %v1636
  %1991 = vmatpush1.msra.mxu0 %v1635
  %1992 = vmatprep.subr.mxu0 %v1638
  %1993 = vmatpush1.msra.mxu0 %v1637
  %1994 = vmatprep.subr.mxu0 %v1640
  %1995 = vmatpush1.msra.mxu0 %v1639
  %1996 = vmatprep.subr.mxu0 %v1642
  %1997 = vmatpush1.msra.mxu0 %v1641
  %1998 = vmatprep.subr.mxu0 %v1644
  %1999 = vmatpush1.msra.mxu0 %v1643
  %2000 = vmatprep.subr.mxu0 %v1646
  %2001 = vmatpush1.msra.mxu0 %v1645
  %2002 = vmatprep.subr.mxu0 %v1648
  %2003 = vmatpush1.msra.mxu0 %v1647
  %2004 = vmatprep.subr.mxu0 0.0
  %2005 = vmatpush1.msra.mxu0 0.0
  %2006 = vmatprep.subr.mxu0 0.0
  %2007 = vmatpush1.msra.mxu0 0.0
  %2008 = vmatprep.subr.mxu0 0.0
  %2009 = vmatpush1.msra.mxu0 0.0
  %2010 = vmatprep.subr.mxu0 0.0
  %2011 = vmatpush1.msra.mxu0 0.0
  %2012 = vmatprep.subr.mxu0 0.0
  %2013 = vmatpush1.msra.mxu0 0.0
  %2014 = vmatprep.subr.mxu0 0.0
  %2015 = vmatpush1.msra.mxu0 0.0
  %2016 = vmatprep.subr.mxu0 0.0
  %2017 = vmatpush1.msra.mxu0 0.0
  %2018 = vmatprep.subr.mxu0 0.0
  %2019 = vmatpush1.msra.mxu0 0.0
  %2020 = vmatprep.subr.mxu0 0.0
  %2021 = vmatpush1.msra.mxu0 0.0
  %2022 = vmatprep.subr.mxu0 0.0
  %2023 = vmatpush1.msra.mxu0 0.0
  %2024 = vmatprep.subr.mxu0 0.0
  %2025 = vmatpush1.msra.mxu0 0.0
  %2026 = vmatprep.subr.mxu0 0.0
  %2027 = vmatpush1.msra.mxu0 0.0
  %2028 = vmatprep.subr.mxu0 0.0
  %2029 = vmatpush1.msra.mxu0 0.0
  %2030 = vmatprep.subr.mxu0 0.0
  %2031 = vmatpush1.msra.mxu0 0.0
  %2032 = vmatprep.subr.mxu0 0.0
  %2033 = vmatpush1.msra.mxu0 0.0
  %2034 = vmatprep.subr.mxu0 0.0
  %2035 = vmatpush1.msra.mxu0 0.0
  %2036 = vmatprep.subr.mxu0 0.0
  %2037 = vmatpush1.msra.mxu0 0.0
  %2038 = vmatprep.subr.mxu0 0.0
  %2039 = vmatpush1.msra.mxu0 0.0
  %2040 = vmatprep.subr.mxu0 0.0
  %2041 = vmatpush1.msra.mxu0 0.0
  %2042 = vmatprep.subr.mxu0 0.0
  %2043 = vmatpush1.msra.mxu0 0.0
  %2044 = vmatprep.subr.mxu0 0.0
  %2045 = vmatpush1.msra.mxu0 0.0
  %2046 = vmatprep.subr.mxu0 0.0
  %2047 = vmatpush1.msra.mxu0 0.0
  %2048 = vmatprep.subr.mxu0 0.0
  %2049 = vmatpush1.msra.mxu0 0.0
  %2050 = vmatprep.subr.mxu0 0.0
  %2051 = vmatpush1.msra.mxu0 0.0
  %2052 = vmatprep.mubr.f32.mxu0 0.0
  %2053 = vmatmul.mubr.f32.gmra.mrb[0].mxu0 %v1986
  %v2054 = vpop.f32.mrb[0].mxu0
  %v2055 = vadd.f32 0.0, %v2054
  %v2056 = vpop.f32.mrb[0].mxu0
  %v2057 = vadd.f32 0.0, %v2056
  %2058 = vdwg.mxu0
  %v2059 = vlaneseq
  %v2060 = vshrl.u32 %v2059, 7
  %v2061 = vsub.s32 0, %v2060
  %v2062 = vrot.slane %v1980, %v2061
  %v2063 = vlaneseq
  %v2064 = vshrl.u32 %v2063, 7
  %v2065 = vsub.s32 0, %v2064
  %v2066 = vrot.slane %v1982, %v2065
  %v2067 = vmul.f32 %v1817, %v2062
  %v2068 = vmul.f32 %v1818, %v2066
  %v2069 = vlaneseq
  %v2070 = vshrl.u32 %v2069, 7
  %v2071 = vsub.s32 0, %v2070
  %v2072 = vrot.slane %v2055, %v2071
  %v2073 = vlaneseq
  %v2074 = vshrl.u32 %v2073, 7
  %v2075 = vsub.s32 0, %v2074
  %v2076 = vrot.slane %v2057, %v2075
  %v2077 = vadd.f32 %v2067, %v2072
  %v2078 = vadd.f32 %v2068, %v2076
  %v2079 = vmax.f32 %v2077, 0.0
  %v2080 = vmax.f32 %v2078, 0.0
  %v2081 = vmax.f32 %v2079, %v2080
  %2083 = vrot.lane.b32.xlu0 %v2081, 64
  %v2084 = vpop.permute.xlu0 %2083
  %v2086 = vmax.f32 %v2081, %v2084
  %v2087 = vpack.c.bf16 %v2086, %v2086
  %v2088 = vld [vmem:[%s4] sm:$0xff]
  %v2089 = vld [vmem:[%s4 + $0x8] sm:$0xff]
  %v2090 = vld [vmem:[%s4 + $0x10] sm:$0xff]
  %v2091 = vld [vmem:[%s4 + $0x18] sm:$0xff]
  %v2092 = vld [vmem:[%s4 + $0x20] sm:$0xff]
  %v2093 = vld [vmem:[%s4 + $0x28] sm:$0xff]
  %v2094 = vld [vmem:[%s4 + $0x30] sm:$0xff]
  %v2095 = vld [vmem:[%s4 + $0x38] sm:$0xff]
  %v2096 = vld [vmem:[%s4 + $0x40] sm:$0xff]
  %v2097 = vld [vmem:[%s4 + $0x48] sm:$0xff]
  %v2098 = vld [vmem:[%s4 + $0x50] sm:$0xff]
  %v2099 = vld [vmem:[%s4 + $0x58] sm:$0xff]
  %v2100 = vld [vmem:[%s4 + $0x60] sm:$0xff]
  %v2101 = vld [vmem:[%s4 + $0x68] sm:$0xff]
  %v2102 = vld [vmem:[%s4 + $0x70] sm:$0xff]
  %v2103 = vld [vmem:[%s4 + $0x78] sm:$0xff]
  %v2104 = vld [vmem:[%s4 + $0x80] sm:$0xff]
  %v2105 = vld [vmem:[%s4 + $0x88] sm:$0xff]
  %v2106 = vld [vmem:[%s4 + $0x90] sm:$0xff]
  %v2107 = vld [vmem:[%s4 + $0x98] sm:$0xff]
  %v2108 = vld [vmem:[%s4 + $0xa0] sm:$0xff]
  %v2109 = vld [vmem:[%s4 + $0xa8] sm:$0xff]
  %v2110 = vld [vmem:[%s4 + $0xb0] sm:$0xff]
  %v2111 = vld [vmem:[%s4 + $0xb8] sm:$0xff]
  %v2112 = vld [vmem:[%s4 + $0xc0] sm:$0xff]
  %v2113 = vld [vmem:[%s4 + $0xc8] sm:$0xff]
  %v2114 = vld [vmem:[%s4 + $0xd0] sm:$0xff]
  %v2115 = vld [vmem:[%s4 + $0xd8] sm:$0xff]
  %v2116 = vld [vmem:[%s4 + $0xe0] sm:$0xff]
  %v2117 = vld [vmem:[%s4 + $0xe8] sm:$0xff]
  %v2118 = vld [vmem:[%s4 + $0xf0] sm:$0xff]
  %v2119 = vld [vmem:[%s4 + $0xf8] sm:$0xff]
  %v2152 = vunpack.c.l.b16 %v2088
  %v2153 = vunpack.c.h.b16 %v2088
  %v2154 = vunpack.c.l.b16 %v2089
  %v2155 = vunpack.c.h.b16 %v2089
  %v2156 = vunpack.c.l.b16 %v2090
  %v2157 = vunpack.c.h.b16 %v2090
  %v2158 = vunpack.c.l.b16 %v2091
  %v2159 = vunpack.c.h.b16 %v2091
  %v2160 = vunpack.c.l.b16 %v2092
  %v2161 = vunpack.c.h.b16 %v2092
  %v2162 = vunpack.c.l.b16 %v2093
  %v2163 = vunpack.c.h.b16 %v2093
  %v2164 = vunpack.c.l.b16 %v2094
  %v2165 = vunpack.c.h.b16 %v2094
  %v2166 = vunpack.c.l.b16 %v2095
  %v2167 = vunpack.c.h.b16 %v2095
  %v2168 = vunpack.c.l.b16 %v2096
  %v2169 = vunpack.c.h.b16 %v2096
  %v2170 = vunpack.c.l.b16 %v2097
  %v2171 = vunpack.c.h.b16 %v2097
  %v2172 = vunpack.c.l.b16 %v2098
  %v2173 = vunpack.c.h.b16 %v2098
  %v2174 = vunpack.c.l.b16 %v2099
  %v2175 = vunpack.c.h.b16 %v2099
  %v2176 = vunpack.c.l.b16 %v2100
  %v2177 = vunpack.c.h.b16 %v2100
  %v2178 = vunpack.c.l.b16 %v2101
  %v2179 = vunpack.c.h.b16 %v2101
  %v2180 = vunpack.c.l.b16 %v2102
  %v2181 = vunpack.c.h.b16 %v2102
  %v2182 = vunpack.c.l.b16 %v2103
  %v2183 = vunpack.c.h.b16 %v2103
  %v2184 = vunpack.c.l.b16 %v2104
  %v2185 = vunpack.c.h.b16 %v2104
  %v2186 = vunpack.c.l.b16 %v2105
  %v2187 = vunpack.c.h.b16 %v2105
  %v2188 = vunpack.c.l.b16 %v2106
  %v2189 = vunpack.c.h.b16 %v2106
  %v2190 = vunpack.c.l.b16 %v2107
  %v2191 = vunpack.c.h.b16 %v2107
  %v2192 = vunpack.c.l.b16 %v2108
  %v2193 = vunpack.c.h.b16 %v2108
  %v2194 = vunpack.c.l.b16 %v2109
  %v2195 = vunpack.c.h.b16 %v2109
  %v2196 = vunpack.c.l.b16 %v2110
  %v2197 = vunpack.c.h.b16 %v2110
  %v2198 = vunpack.c.l.b16 %v2111
  %v2199 = vunpack.c.h.b16 %v2111
  %v2200 = vunpack.c.l.b16 %v2112
  %v2201 = vunpack.c.h.b16 %v2112
  %v2202 = vunpack.c.l.b16 %v2113
  %v2203 = vunpack.c.h.b16 %v2113
  %v2204 = vunpack.c.l.b16 %v2114
  %v2205 = vunpack.c.h.b16 %v2114
  %v2206 = vunpack.c.l.b16 %v2115
  %v2207 = vunpack.c.h.b16 %v2115
  %v2208 = vunpack.c.l.b16 %v2116
  %v2209 = vunpack.c.h.b16 %v2116
  %v2210 = vunpack.c.l.b16 %v2117
  %v2211 = vunpack.c.h.b16 %v2117
  %v2212 = vunpack.c.l.b16 %v2118
  %v2213 = vunpack.c.h.b16 %v2118
  %v2214 = vunpack.c.l.b16 %v2119
  %v2215 = vunpack.c.h.b16 %v2119
  %v2216 = vpack.c.b16 %v2160, %v2152
  %v2217 = vpack.c.b16 %v2161, %v2153
  %v2218 = vpack.c.b16 %v2162, %v2154
  %v2219 = vpack.c.b16 %v2163, %v2155
  %v2220 = vpack.c.b16 %v2164, %v2156
  %v2221 = vpack.c.b16 %v2165, %v2157
  %v2222 = vpack.c.b16 %v2166, %v2158
  %v2223 = vpack.c.b16 %v2167, %v2159
  %v2224 = vpack.c.b16 %v2176, %v2168
  %v2225 = vpack.c.b16 %v2177, %v2169
  %v2226 = vpack.c.b16 %v2178, %v2170
  %v2227 = vpack.c.b16 %v2179, %v2171
  %v2228 = vpack.c.b16 %v2180, %v2172
  %v2229 = vpack.c.b16 %v2181, %v2173
  %v2230 = vpack.c.b16 %v2182, %v2174
  %v2231 = vpack.c.b16 %v2183, %v2175
  %v2232 = vpack.c.b16 %v2192, %v2184
  %v2233 = vpack.c.b16 %v2193, %v2185
  %v2234 = vpack.c.b16 %v2194, %v2186
  %v2235 = vpack.c.b16 %v2195, %v2187
  %v2236 = vpack.c.b16 %v2196, %v2188
  %v2237 = vpack.c.b16 %v2197, %v2189
  %v2238 = vpack.c.b16 %v2198, %v2190
  %v2239 = vpack.c.b16 %v2199, %v2191
  %v2240 = vpack.c.b16 %v2208, %v2200
  %v2241 = vpack.c.b16 %v2209, %v2201
  %v2242 = vpack.c.b16 %v2210, %v2202
  %v2243 = vpack.c.b16 %v2211, %v2203
  %v2244 = vpack.c.b16 %v2212, %v2204
  %v2245 = vpack.c.b16 %v2213, %v2205
  %v2246 = vpack.c.b16 %v2214, %v2206
  %v2247 = vpack.c.b16 %v2215, %v2207
  %v2281 = vsel %vm564, %v2087, 0
  %2283 = vmatprep.subr.bf16.mxu0 %v2217
  %2284 = vmatpush1.bf16.msra.mxu0 %v2216
  %2285 = vmatprep.subr.bf16.mxu0 %v2225
  %2286 = vmatpush1.bf16.msra.mxu0 %v2224
  %2287 = vmatprep.subr.bf16.mxu0 %v2233
  %2288 = vmatpush1.bf16.msra.mxu0 %v2232
  %2289 = vmatprep.subr.bf16.mxu0 %v2241
  %2290 = vmatpush1.bf16.msra.mxu0 %v2240
  %2291 = vmatprep.subr.bf16.mxu0 0
  %2292 = vmatpush1.bf16.msra.mxu0 0
  %2293 = vmatprep.subr.bf16.mxu0 0
  %2294 = vmatpush1.bf16.msra.mxu0 0
  %2295 = vmatprep.subr.bf16.mxu0 0
  %2296 = vmatpush1.bf16.msra.mxu0 0
  %2297 = vmatprep.subr.bf16.mxu0 0
  %2298 = vmatpush1.bf16.msra.mxu0 0
  %2299 = vmatprep.subr.bf16.mxu0 0
  %2300 = vmatpush1.bf16.msra.mxu0 0
  %2301 = vmatprep.subr.bf16.mxu0 0
  %2302 = vmatpush1.bf16.msra.mxu0 0
  %2303 = vmatprep.subr.bf16.mxu0 0
  %2304 = vmatpush1.bf16.msra.mxu0 0
  %2305 = vmatprep.subr.bf16.mxu0 0
  %2306 = vmatpush1.bf16.msra.mxu0 0
  %2307 = vmatprep.subr.bf16.mxu0 0
  %2308 = vmatpush1.bf16.msra.mxu0 0
  %2309 = vmatprep.subr.bf16.mxu0 0
  %2310 = vmatpush1.bf16.msra.mxu0 0
  %2311 = vmatprep.subr.bf16.mxu0 0
  %2312 = vmatpush1.bf16.msra.mxu0 0
  %2313 = vmatprep.subr.bf16.mxu0 0
  %2314 = vmatpush1.bf16.msra.mxu0 0
  %2315 = vmatprep.mubr.bf16.mxu0 0
  %2316 = vmatmul.mubr.bf16.gmra.mrb[0].mxu0 %v2281
  %v2317 = vpop.f32.mrb[0].mxu0
  %v2318 = vadd.f32 0.0, %v2317
  %v2319 = vpop.f32.mrb[0].mxu0
  %v2320 = vadd.f32 0.0, %v2319
  %v2321 = vpop.f32.mrb[0].mxu0
  %v2322 = vpop.f32.mrb[0].mxu0
  %2323 = vdwg.mxu0
  %2324 = vmatprep.subr.bf16.mxu0 %v2219
  %2325 = vmatpush1.bf16.msra.mxu0 %v2218
  %2326 = vmatprep.subr.bf16.mxu0 %v2227
  %2327 = vmatpush1.bf16.msra.mxu0 %v2226
  %2328 = vmatprep.subr.bf16.mxu0 %v2235
  %2329 = vmatpush1.bf16.msra.mxu0 %v2234
  %2330 = vmatprep.subr.bf16.mxu0 %v2243
  %2331 = vmatpush1.bf16.msra.mxu0 %v2242
  %2332 = vmatprep.subr.bf16.mxu0 0
  %2333 = vmatpush1.bf16.msra.mxu0 0
  %2334 = vmatprep.subr.bf16.mxu0 0
  %2335 = vmatpush1.bf16.msra.mxu0 0
  %2336 = vmatprep.subr.bf16.mxu0 0
  %2337 = vmatpush1.bf16.msra.mxu0 0
  %2338 = vmatprep.subr.bf16.mxu0 0
  %2339 = vmatpush1.bf16.msra.mxu0 0
  %2340 = vmatprep.subr.bf16.mxu0 0
  %2341 = vmatpush1.bf16.msra.mxu0 0
  %2342 = vmatprep.subr.bf16.mxu0 0
  %2343 = vmatpush1.bf16.msra.mxu0 0
  %2344 = vmatprep.subr.bf16.mxu0 0
  %2345 = vmatpush1.bf16.msra.mxu0 0
  %2346 = vmatprep.subr.bf16.mxu0 0
  %2347 = vmatpush1.bf16.msra.mxu0 0
  %2348 = vmatprep.subr.bf16.mxu0 0
  %2349 = vmatpush1.bf16.msra.mxu0 0
  %2350 = vmatprep.subr.bf16.mxu0 0
  %2351 = vmatpush1.bf16.msra.mxu0 0
  %2352 = vmatprep.subr.bf16.mxu0 0
  %2353 = vmatpush1.bf16.msra.mxu0 0
  %2354 = vmatprep.subr.bf16.mxu0 0
  %2355 = vmatpush1.bf16.msra.mxu0 0
  %2356 = vmatprep.mubr.bf16.mxu0 0
  %2357 = vmatmul.mubr.bf16.gmra.mrb[0].mxu0 %v2281
  %v2358 = vpop.f32.mrb[0].mxu0
  %v2359 = vadd.f32 0.0, %v2358
  %v2360 = vpop.f32.mrb[0].mxu0
  %v2361 = vadd.f32 0.0, %v2360
  %v2362 = vpop.f32.mrb[0].mxu0
  %v2363 = vpop.f32.mrb[0].mxu0
  %2364 = vdwg.mxu0
  %2365 = vmatprep.subr.bf16.mxu0 %v2221
  %2366 = vmatpush1.bf16.msra.mxu0 %v2220
  %2367 = vmatprep.subr.bf16.mxu0 %v2229
  %2368 = vmatpush1.bf16.msra.mxu0 %v2228
  %2369 = vmatprep.subr.bf16.mxu0 %v2237
  %2370 = vmatpush1.bf16.msra.mxu0 %v2236
  %2371 = vmatprep.subr.bf16.mxu0 %v2245
  %2372 = vmatpush1.bf16.msra.mxu0 %v2244
  %2373 = vmatprep.subr.bf16.mxu0 0
  %2374 = vmatpush1.bf16.msra.mxu0 0
  %2375 = vmatprep.subr.bf16.mxu0 0
  %2376 = vmatpush1.bf16.msra.mxu0 0
  %2377 = vmatprep.subr.bf16.mxu0 0
  %2378 = vmatpush1.bf16.msra.mxu0 0
  %2379 = vmatprep.subr.bf16.mxu0 0
  %2380 = vmatpush1.bf16.msra.mxu0 0
  %2381 = vmatprep.subr.bf16.mxu0 0
  %2382 = vmatpush1.bf16.msra.mxu0 0
  %2383 = vmatprep.subr.bf16.mxu0 0
  %2384 = vmatpush1.bf16.msra.mxu0 0
  %2385 = vmatprep.subr.bf16.mxu0 0
  %2386 = vmatpush1.bf16.msra.mxu0 0
  %2387 = vmatprep.subr.bf16.mxu0 0
  %2388 = vmatpush1.bf16.msra.mxu0 0
  %2389 = vmatprep.subr.bf16.mxu0 0
  %2390 = vmatpush1.bf16.msra.mxu0 0
  %2391 = vmatprep.subr.bf16.mxu0 0
  %2392 = vmatpush1.bf16.msra.mxu0 0
  %2393 = vmatprep.subr.bf16.mxu0 0
  %2394 = vmatpush1.bf16.msra.mxu0 0
  %2395 = vmatprep.subr.bf16.mxu0 0
  %2396 = vmatpush1.bf16.msra.mxu0 0
  %2397 = vmatprep.mubr.bf16.mxu0 0
  %2398 = vmatmul.mubr.bf16.gmra.mrb[0].mxu0 %v2281
  %v2399 = vpop.f32.mrb[0].mxu0
  %v2400 = vadd.f32 0.0, %v2399
  %v2401 = vpop.f32.mrb[0].mxu0
  %v2402 = vadd.f32 0.0, %v2401
  %v2403 = vpop.f32.mrb[0].mxu0
  %v2404 = vpop.f32.mrb[0].mxu0
  %2405 = vdwg.mxu0
  %2406 = vmatprep.subr.bf16.mxu0 %v2223
  %2407 = vmatpush1.bf16.msra.mxu0 %v2222
  %2408 = vmatprep.subr.bf16.mxu0 %v2231
  %2409 = vmatpush1.bf16.msra.mxu0 %v2230
  %2410 = vmatprep.subr.bf16.mxu0 %v2239
  %2411 = vmatpush1.bf16.msra.mxu0 %v2238
  %2412 = vmatprep.subr.bf16.mxu0 %v2247
  %2413 = vmatpush1.bf16.msra.mxu0 %v2246
  %2414 = vmatprep.subr.bf16.mxu0 0
  %2415 = vmatpush1.bf16.msra.mxu0 0
  %2416 = vmatprep.subr.bf16.mxu0 0
  %2417 = vmatpush1.bf16.msra.mxu0 0
  %2418 = vmatprep.subr.bf16.mxu0 0
  %2419 = vmatpush1.bf16.msra.mxu0 0
  %2420 = vmatprep.subr.bf16.mxu0 0
  %2421 = vmatpush1.bf16.msra.mxu0 0
  %2422 = vmatprep.subr.bf16.mxu0 0
  %2423 = vmatpush1.bf16.msra.mxu0 0
  %2424 = vmatprep.subr.bf16.mxu0 0
  %2425 = vmatpush1.bf16.msra.mxu0 0
  %2426 = vmatprep.subr.bf16.mxu0 0
  %2427 = vmatpush1.bf16.msra.mxu0 0
  %2428 = vmatprep.subr.bf16.mxu0 0
  %2429 = vmatpush1.bf16.msra.mxu0 0
  %2430 = vmatprep.subr.bf16.mxu0 0
  %2431 = vmatpush1.bf16.msra.mxu0 0
  %2432 = vmatprep.subr.bf16.mxu0 0
  %2433 = vmatpush1.bf16.msra.mxu0 0
  %2434 = vmatprep.subr.bf16.mxu0 0
  %2435 = vmatpush1.bf16.msra.mxu0 0
  %2436 = vmatprep.subr.bf16.mxu0 0
  %2437 = vmatpush1.bf16.msra.mxu0 0
  %2438 = vmatprep.mubr.bf16.mxu0 0
  %2439 = vmatmul.mubr.bf16.gmra.mrb[0].mxu0 %v2281
  %v2440 = vpop.f32.mrb[0].mxu0
  %v2441 = vadd.f32 0.0, %v2440
  %v2442 = vpop.f32.mrb[0].mxu0
  %v2443 = vadd.f32 0.0, %v2442
  %v2444 = vpop.f32.mrb[0].mxu0
  %v2445 = vpop.f32.mrb[0].mxu0
  %2446 = vdwg.mxu0
  %v2447 = vld [vmem:[%s1] sm:$0xff]
  %v2448 = vld [vmem:[%s1 + $0x8] sm:$0xff]
  %v2457 = vcombine.low %v2318, %v2320
  %v2458 = vcombine.low %v2359, %v2361
  %v2460 = vunpack.c.l.s4 1983009808
  %v2461 = vunpack.c.0.s8 %v2460
  %v2462 = vlaneseq
  %v2463 = vshrl.u32 %v2462, 7
  %v2464 = vsub.s32 %v2461, %v2463
  %v2465 = vrot.slane %v2457, %v2464
  %v2467 = vunpack.c.l.s4 1983009808
  %v2468 = vunpack.c.0.s8 %v2467
  %v2469 = vlaneseq
  %v2470 = vshrl.u32 %v2469, 7
  %v2471 = vsub.s32 %v2468, %v2470
  %v2472 = vrot.slane %v2458, %v2471
  %v2473 = vcombine.low %v2465, %v2472
  %v2474 = vcombine.low %v2400, %v2402
  %v2475 = vcombine.low %v2441, %v2443
  %v2477 = vunpack.c.l.s4 1983009808
  %v2478 = vunpack.c.0.s8 %v2477
  %v2479 = vlaneseq
  %v2480 = vshrl.u32 %v2479, 7
  %v2481 = vsub.s32 %v2478, %v2480
  %v2482 = vrot.slane %v2474, %v2481
  %v2484 = vunpack.c.l.s4 1983009808
  %v2485 = vunpack.c.0.s8 %v2484
  %v2486 = vlaneseq
  %v2487 = vshrl.u32 %v2486, 7
  %v2488 = vsub.s32 %v2485, %v2487
  %v2489 = vrot.slane %v2475, %v2488
  %v2490 = vcombine.low %v2482, %v2489
  %v2493 = vadd.f32 %v2447, %v2473
  %v2494 = vadd.f32 %v2448, %v2490
  %2495 = vst [vmem:[%s9] sm:$0xff] %v2493
  %2496 = vst [vmem:[%s9 + $0x8] sm:$0xff] %v2494
  // Predicated region
  $region38: #{model_forward.1} parent=0 // pred_check
    _
  $region39: #{model_forward.1} parent=0 // pred_check_branch
    %2498 = sbr.rel (0) target = $region41
  $region40: #{model_forward.1} parent=0 // pred_region
    _
  $region41: #{model_forward.1} parent=0 // pred_fallthru
    _
  // Predicated region
  $region42: #{model_forward.1} parent=0 // pred_check
    _
  $region43: #{model_forward.1} parent=0 // pred_check_branch
    %2500 = sbr.rel (0) target = $region45
  $region44: #{model_forward.1} parent=0 // pred_region
    _
  $region45: #{model_forward.1} parent=0 // pred_fallthru
    _

</llo_original>
